<compile_context>
chip_gen: v7x
topology: tpu7x:2x2x1
jax: 0.10.0
libtpu: 0.0.40
codegen_flags: <defaults>
</compile_context>

<pallas_src>
import functools

import jax
import jax.numpy as jnp
from jax import lax
from jax.experimental import pallas as pl
from jax.experimental.pallas import tpu as pltpu

EPS = 1e-5


def _make_kernel(N, H, W, Cin, Cout, use_1x1conv):
    NH = N * H
    WCi = W * Cin
    WCo = W * Cout
    inv_P = 1.0 / float(N * H * W)

    def kernel(*refs):
        if use_1x1conv:
            (x_ref, m1_ref, g1_ref, bt1_ref, m2_ref, g2_ref, bt2_ref,
             t_ref, m3_ref, b3_ref, out_ref, xpad_ref, ypad_ref) = refs
        else:
            (x_ref, m1_ref, g1_ref, bt1_ref, m2_ref, g2_ref, bt2_ref,
             t_ref, out_ref, xpad_ref, ypad_ref) = refs
            m3_ref = b3_ref = None

        # --- zero only the vertical 1-pixel halo rows (interior is overwritten below) ---
        zi = jnp.zeros((N, 1, WCi), jnp.float32)
        xpad_ref[:, 0:1, :] = zi
        xpad_ref[:, H + 1:H + 2, :] = zi
        zo = jnp.zeros((N, 1, WCo), jnp.float32)
        ypad_ref[:, 0:1, :] = zo
        ypad_ref[:, H + 1:H + 2, :] = zo

        # --- load X into the padded buffer interior (lane-aligned, full-width store) ---
        x = x_ref[...]                              # (N, H, W*Cin)
        xpad_ref[:, 1:H + 1, :] = x

        def conv3x3(pad_ref, m_ref):
            # out[n*H+h, :] = sum_dy pad[n, h+dy, :] @ M_dy   (horizontal pad folded into M_dy)
            wc = pad_ref.shape[-1]
            acc = jnp.zeros((NH, WCo), jnp.float32)
            for dy in range(3):
                lhs = pad_ref[:, dy:dy + H, :].reshape(NH, wc)
                acc = acc + jnp.dot(lhs, m_ref[dy],
                                    preferred_element_type=jnp.float32)
            return acc                              # (N*H, W*Cout)

        def batchnorm(a, g_ref, bt_ref):
            # Train-mode BN, single pass: sums + sums-of-squares, channel fold via one
            # small MXU matmul (T = kron(ones(W,W), eye(Cout)) also re-tiles per channel).
            s = jnp.concatenate(
                [jnp.sum(a, axis=0, keepdims=True),
                 jnp.sum(a * a, axis=0, keepdims=True)], axis=0)          # (2, W*Cout)
            st = jnp.dot(s, t_ref[...], preferred_element_type=jnp.float32) * inv_P
            mean = st[0:1, :]
            var = st[1:2, :] - mean * mean
            scale = g_ref[...] * lax.rsqrt(var + EPS)
            offset = bt_ref[...] - mean * scale
            return a * scale + offset               # one fused FMA over (N*H, W*Cout)

        # Y = relu(bn1(conv1(X)))   (conv bias omitted: cancelled by train-mode BN)
        y = conv3x3(xpad_ref, m1_ref)
        y = jnp.maximum(batchnorm(y, g1_ref, bt1_ref), 0.0)

        # Y = bn2(conv2(Y))
        ypad_ref[:, 1:H + 1, :] = y.reshape(N, H, WCo)
        z = conv3x3(ypad_ref, m2_ref)
        z = batchnorm(z, g2_ref, bt2_ref)

        # skip connection
        if use_1x1conv:
            skip = jnp.dot(x.reshape(NH, WCi), m3_ref[...],
                           preferred_element_type=jnp.float32) + b3_ref[...]
        else:
            skip = x.reshape(NH, WCi)               # Cin == Cout asserted in wrapper

        out_ref[...] = jnp.maximum(z + skip, 0.0)   # (N*H, W*Cout), lane-dense unmasked store

    return kernel


# ---------------- wrapper-side layout plumbing (free at trace time) ----------------
def _conv_band_matrix(w, W):
    """w: (3, 3, Cin, Cout) HWIO -> (3, W*Cin, W*Cout) banded block-Toeplitz per kernel row.

    M_dy[(w+dx-1)*Cin + ci, w*Cout + co] = w[dy, dx, ci, co]; out-of-range taps are simply
    absent, which implements the horizontal 'same' zero-padding for free.
    """
    mats = []
    for dy in range(3):
        m = sum(jnp.kron(jnp.eye(W, k=1 - dx, dtype=w.dtype), w[dy, dx])
                for dx in range(3))
        mats.append(m)
    return jnp.stack(mats)


def residual_forward(x, params, use_1x1conv=False):
    """x: (N, H, W, Cin) float32 NHWC.  Returns (N, H, W, Cout) float32."""
    N, H, W, Cin = x.shape
    Cout = params["w1"].shape[-1]
    if not use_1x1conv:
        assert Cin == Cout, "identity skip requires input_channels == num_channels"

    def tile_c(v):  # per-channel (Cout,) -> (1, W*Cout) matching the (W*C) lane layout
        return jnp.tile(v.reshape(1, Cout), (1, W))

    m1 = _conv_band_matrix(params["w1"], W)                 # (3, W*Cin,  W*Cout)
    m2 = _conv_band_matrix(params["w2"], W)                 # (3, W*Cout, W*Cout)
    g1t, bt1t = tile_c(params["g1"]), tile_c(params["bt1"])
    g2t, bt2t = tile_c(params["g2"]), tile_c(params["bt2"])
    # Channel fold + re-tile matrix for BN statistics.
    T = jnp.kron(jnp.ones((W, W), jnp.float32), jnp.eye(Cout, dtype=jnp.float32))
    x3 = x.reshape(N, H, W * Cin)

    args = [x3, m1, g1t, bt1t, m2, g2t, bt2t, T]
    if use_1x1conv:
        m3 = jnp.kron(jnp.eye(W, dtype=jnp.float32), params["w3"])   # (W*Cin, W*Cout)
        args += [m3, tile_c(params["b3"])]

    out2d = pl.pallas_call(
        _make_kernel(N, H, W, Cin, Cout, use_1x1conv),
        out_shape=jax.ShapeDtypeStruct((N * H, W * Cout), jnp.float32),
        in_specs=[pl.BlockSpec(memory_space=pltpu.MemorySpace.VMEM)] * len(args),
        out_specs=pl.BlockSpec(memory_space=pltpu.MemorySpace.VMEM),
        scratch_shapes=[
            pltpu.VMEM((N, H + 2, W * Cin), jnp.float32),   # vertically padded X
            pltpu.VMEM((N, H + 2, W * Cout), jnp.float32),  # vertically padded Y
        ],
    )(*args)
    return out2d.reshape(N, H, W, Cout)


# ---------------- pure-JAX reference (for correctness check) ----------------
def _bn_ref(y, g, bt):
    mean = jnp.mean(y, axis=(0, 1, 2), keepdims=True)
    var = jnp.mean((y - mean) ** 2, axis=(0, 1, 2), keepdims=True)
    return (y - mean) * lax.rsqrt(var + EPS) * g.reshape(1, 1, 1, -1) + bt.reshape(1, 1, 1, -1)


def residual_ref(x, p, use_1x1conv=False):
    dn = ("NHWC", "HWIO", "NHWC")
    y = lax.conv_general_dilated(x, p["w1"], (1, 1), "SAME",
                                 dimension_numbers=dn) + p["b1"].reshape(1, 1, 1, -1)
    y = jnp.maximum(_bn_ref(y, p["g1"], p["bt1"]), 0.0)
    y = lax.conv_general_dilated(y, p["w2"], (1, 1), "SAME",
                                 dimension_numbers=dn) + p["b2"].reshape(1, 1, 1, -1)
    y = _bn_ref(y, p["g2"], p["bt2"])
    skip = x
    if use_1x1conv:
        skip = lax.conv_general_dilated(
            x, p["w3"].reshape(1, 1, *p["w3"].shape), (1, 1), "SAME",
            dimension_numbers=dn) + p["b3"].reshape(1, 1, 1, -1)
    return jnp.maximum(y + skip, 0.0)


def make_params(key, cin, cout, use_1x1conv=False):
    ks = jax.random.split(key, 11)
    p = {
        "w1": 0.1 * jax.random.normal(ks[0], (3, 3, cin, cout), jnp.float32),
        "b1": 0.1 * jax.random.normal(ks[1], (1, cout), jnp.float32),
        "g1": 1.0 + 0.1 * jax.random.normal(ks[2], (1, cout), jnp.float32),
        "bt1": 0.1 * jax.random.normal(ks[3], (1, cout), jnp.float32),
        "w2": 0.1 * jax.random.normal(ks[4], (3, 3, cout, cout), jnp.float32),
        "b2": 0.1 * jax.random.normal(ks[5], (1, cout), jnp.float32),
        "g2": 1.0 + 0.1 * jax.random.normal(ks[6], (1, cout), jnp.float32),
        "bt2": 0.1 * jax.random.normal(ks[7], (1, cout), jnp.float32),
    }
    if use_1x1conv:
        p["w3"] = 0.1 * jax.random.normal(ks[8], (cin, cout), jnp.float32)
        p["b3"] = 0.1 * jax.random.normal(ks[9], (1, cout), jnp.float32)
    return p


if __name__ == "__main__":
    key = jax.random.PRNGKey(0)
    k_x1, k_p1, k_x2, k_p2 = jax.random.split(key, 4)

    # Case 1: Residual(num_channels, num_channels, use_1x1conv=False, strides=1)
    # (reference still adds the conv biases -> verifies the BN bias-cancellation is exact)
    N, H, W, C = 2, 16, 16, 8
    x1 = jax.random.normal(k_x1, (N, H, W, C), jnp.float32)
    p1 = make_params(k_p1, C, C, use_1x1conv=False)
    out1 = jax.block_until_ready(residual_forward(x1, p1, use_1x1conv=False))
    ref1 = residual_ref(x1, p1, use_1x1conv=False)
    assert out1.shape == (N, H, W, C)
    assert jnp.allclose(out1, ref1, atol=1e-4, rtol=1e-4), "mismatch (identity skip)"

    # Case 2: Residual(4, 8, use_1x1conv=True, strides=1)
    Cin, Cout = 4, 8
    x2 = jax.random.normal(k_x2, (N, H, W, Cin), jnp.float32)
    p2 = make_params(k_p2, Cin, Cout, use_1x1conv=True)
    out2 = jax.block_until_ready(residual_forward(x2, p2, use_1x1conv=True))
    ref2 = residual_ref(x2, p2, use_1x1conv=True)
    assert out2.shape == (N, H, W, Cout)
    assert jnp.allclose(out2, ref2, atol=1e-4, rtol=1e-4), "mismatch (1x1 conv skip)"

    print("KERNEL_OK")
</pallas_src>

<mosaic_0001>
module attributes {stable_mosaic.version = 11 : i64} {
  func.func @kernel(%arg0: memref<2x16x128xf32, #tpu.memory_space<vmem>>, %arg1: memref<3x128x128xf32, #tpu.memory_space<vmem>>, %arg2: memref<1x128xf32, #tpu.memory_space<vmem>>, %arg3: memref<1x128xf32, #tpu.memory_space<vmem>>, %arg4: memref<3x128x128xf32, #tpu.memory_space<vmem>>, %arg5: memref<1x128xf32, #tpu.memory_space<vmem>>, %arg6: memref<1x128xf32, #tpu.memory_space<vmem>>, %arg7: memref<128x128xf32, #tpu.memory_space<vmem>>, %arg8: memref<32x128xf32, #tpu.memory_space<vmem>>, %arg9: memref<2x18x128xf32, #tpu.memory_space<vmem>>, %arg10: memref<2x18x128xf32, #tpu.memory_space<vmem>>) attributes {dimension_semantics = [], scalar_prefetch = 0 : i64, scratch_operands = 2 : i64, tpu.core_type = #tpu.core_type<tc>} {
    %cst = arith.constant 0.000000e+00 : f32
    %0 = vector.broadcast %cst : f32 to vector<2x1x128xf32>
    %c0 = arith.constant 0 : index
    %c0_0 = arith.constant 0 : index
    %c0_1 = arith.constant 0 : index
    %1 = vector.load %arg9[%c0, %c0_0, %c0_1] : memref<2x18x128xf32, #tpu.memory_space<vmem>>, vector<2x1x128xf32>
    tpu.vector_store %arg9[%c0, %c0_0, %c0_1], %0 {strides = array<i32>} : memref<2x18x128xf32, #tpu.memory_space<vmem>>, vector<2x1x128xf32>,
    %c0_2 = arith.constant 0 : index
    %c17 = arith.constant 17 : index
    %c0_3 = arith.constant 0 : index
    %2 = vector.load %arg9[%c0_2, %c17, %c0_3] : memref<2x18x128xf32, #tpu.memory_space<vmem>>, vector<2x1x128xf32>
    tpu.vector_store %arg9[%c0_2, %c17, %c0_3], %0 {strides = array<i32>} : memref<2x18x128xf32, #tpu.memory_space<vmem>>, vector<2x1x128xf32>,
    %cst_4 = arith.constant 0.000000e+00 : f32
    %3 = vector.broadcast %cst_4 : f32 to vector<2x1x128xf32>
    %c0_5 = arith.constant 0 : index
    %c0_6 = arith.constant 0 : index
    %c0_7 = arith.constant 0 : index
    %4 = vector.load %arg10[%c0_5, %c0_6, %c0_7] : memref<2x18x128xf32, #tpu.memory_space<vmem>>, vector<2x1x128xf32>
    tpu.vector_store %arg10[%c0_5, %c0_6, %c0_7], %3 {strides = array<i32>} : memref<2x18x128xf32, #tpu.memory_space<vmem>>, vector<2x1x128xf32>,
    %c0_8 = arith.constant 0 : index
    %c17_9 = arith.constant 17 : index
    %c0_10 = arith.constant 0 : index
    %5 = vector.load %arg10[%c0_8, %c17_9, %c0_10] : memref<2x18x128xf32, #tpu.memory_space<vmem>>, vector<2x1x128xf32>
    tpu.vector_store %arg10[%c0_8, %c17_9, %c0_10], %3 {strides = array<i32>} : memref<2x18x128xf32, #tpu.memory_space<vmem>>, vector<2x1x128xf32>,
    %c0_11 = arith.constant 0 : index
    %c0_12 = arith.constant 0 : index
    %c0_13 = arith.constant 0 : index
    %6 = vector.load %arg0[%c0_11, %c0_12, %c0_13] : memref<2x16x128xf32, #tpu.memory_space<vmem>>, vector<2x16x128xf32>
    %c0_14 = arith.constant 0 : index
    %c1 = arith.constant 1 : index
    %c0_15 = arith.constant 0 : index
    %7 = vector.load %arg9[%c0_14, %c1, %c0_15] : memref<2x18x128xf32, #tpu.memory_space<vmem>>, vector<2x16x128xf32>
    tpu.vector_store %arg9[%c0_14, %c1, %c0_15], %6 {strides = array<i32>} : memref<2x18x128xf32, #tpu.memory_space<vmem>>, vector<2x16x128xf32>,
    %cst_16 = arith.constant 0.000000e+00 : f32
    %8 = vector.broadcast %cst_16 : f32 to vector<32x128xf32>
    %c0_17 = arith.constant 0 : index
    %c0_18 = arith.constant 0 : index
    %c0_19 = arith.constant 0 : index
    %9 = vector.load %arg9[%c0_17, %c0_18, %c0_19] : memref<2x18x128xf32, #tpu.memory_space<vmem>>, vector<2x16x128xf32>
    %10 = vector.shape_cast %9 : vector<2x16x128xf32> to vector<32x128xf32>
    %c0_20 = arith.constant 0 : index
    %c0_21 = arith.constant 0 : index
    %c0_22 = arith.constant 0 : index
    %11 = vector.load %arg1[%c0_20, %c0_21, %c0_22] : memref<3x128x128xf32, #tpu.memory_space<vmem>>, vector<1x128x128xf32>
    %12 = vector.shape_cast %11 : vector<1x128x128xf32> to vector<128x128xf32>
    %cst_23 = arith.constant dense<0.000000e+00> : vector<32x128xf32>
    %13 = tpu.matmul %10, %12, %cst_23 {dimension_numbers = #tpu.dot_dimension_numbers<[1], [0], [0], [1], [0, 0, 1, 1], [], []>} : vector<32x128xf32>, vector<128x128xf32>, vector<32x128xf32> -> vector<32x128xf32>
    %14 = arith.addf %8, %13 : vector<32x128xf32>
    %c0_24 = arith.constant 0 : index
    %c1_25 = arith.constant 1 : index
    %c0_26 = arith.constant 0 : index
    %15 = vector.load %arg9[%c0_24, %c1_25, %c0_26] : memref<2x18x128xf32, #tpu.memory_space<vmem>>, vector<2x16x128xf32>
    %16 = vector.shape_cast %15 : vector<2x16x128xf32> to vector<32x128xf32>
    %c1_27 = arith.constant 1 : index
    %c0_28 = arith.constant 0 : index
    %c0_29 = arith.constant 0 : index
    %17 = vector.load %arg1[%c1_27, %c0_28, %c0_29] : memref<3x128x128xf32, #tpu.memory_space<vmem>>, vector<1x128x128xf32>
    %18 = vector.shape_cast %17 : vector<1x128x128xf32> to vector<128x128xf32>
    %cst_30 = arith.constant dense<0.000000e+00> : vector<32x128xf32>
    %19 = tpu.matmul %16, %18, %cst_30 {dimension_numbers = #tpu.dot_dimension_numbers<[1], [0], [0], [1], [0, 0, 1, 1], [], []>} : vector<32x128xf32>, vector<128x128xf32>, vector<32x128xf32> -> vector<32x128xf32>
    %20 = arith.addf %14, %19 : vector<32x128xf32>
    %c0_31 = arith.constant 0 : index
    %c2 = arith.constant 2 : index
    %c0_32 = arith.constant 0 : index
    %21 = vector.load %arg9[%c0_31, %c2, %c0_32] : memref<2x18x128xf32, #tpu.memory_space<vmem>>, vector<2x16x128xf32>
    %22 = vector.shape_cast %21 : vector<2x16x128xf32> to vector<32x128xf32>
    %c2_33 = arith.constant 2 : index
    %c0_34 = arith.constant 0 : index
    %c0_35 = arith.constant 0 : index
    %23 = vector.load %arg1[%c2_33, %c0_34, %c0_35] : memref<3x128x128xf32, #tpu.memory_space<vmem>>, vector<1x128x128xf32>
    %24 = vector.shape_cast %23 : vector<1x128x128xf32> to vector<128x128xf32>
    %cst_36 = arith.constant dense<0.000000e+00> : vector<32x128xf32>
    %25 = tpu.matmul %22, %24, %cst_36 {dimension_numbers = #tpu.dot_dimension_numbers<[1], [0], [0], [1], [0, 0, 1, 1], [], []>} : vector<32x128xf32>, vector<128x128xf32>, vector<32x128xf32> -> vector<32x128xf32>
    %26 = arith.addf %20, %25 : vector<32x128xf32>
    %cst_37 = arith.constant dense<0.000000e+00> : vector<128xf32>
    %27 = vector.multi_reduction <add>, %26, %cst_37 [0] : vector<32x128xf32> to vector<128xf32>
    %28 = vector.shape_cast %27 : vector<128xf32> to vector<1x128xf32>
    %29 = arith.mulf %26, %26 : vector<32x128xf32>
    %cst_38 = arith.constant dense<0.000000e+00> : vector<128xf32>
    %30 = vector.multi_reduction <add>, %29, %cst_38 [0] : vector<32x128xf32> to vector<128xf32>
    %31 = vector.shape_cast %30 : vector<128xf32> to vector<1x128xf32>
    %32 = tpu.concatenate %28, %31 in 0 : vector<1x128xf32>, vector<1x128xf32> -> vector<2x128xf32>
    %c0_39 = arith.constant 0 : index
    %c0_40 = arith.constant 0 : index
    %33 = vector.load %arg7[%c0_39, %c0_40] : memref<128x128xf32, #tpu.memory_space<vmem>>, vector<128x128xf32>
    %cst_41 = arith.constant dense<0.000000e+00> : vector<2x128xf32>
    %34 = tpu.matmul %32, %33, %cst_41 {dimension_numbers = #tpu.dot_dimension_numbers<[1], [0], [0], [1], [0, 0, 1, 1], [], []>} : vector<2x128xf32>, vector<128x128xf32>, vector<2x128xf32> -> vector<2x128xf32>
    %cst_42 = arith.constant 0.001953125 : f32
    %35 = vector.broadcast %cst_42 : f32 to vector<2x128xf32>
    %36 = arith.mulf %34, %35 : vector<2x128xf32>
    %37 = vector.extract_strided_slice %36 {offsets = [0, 0], sizes = [1, 128], strides = [1, 1]} : vector<2x128xf32> to vector<1x128xf32>
    %38 = vector.extract_strided_slice %36 {offsets = [1, 0], sizes = [1, 128], strides = [1, 1]} : vector<2x128xf32> to vector<1x128xf32>
    %39 = arith.mulf %37, %37 : vector<1x128xf32>
    %40 = arith.subf %38, %39 : vector<1x128xf32>
    %c0_43 = arith.constant 0 : index
    %c0_44 = arith.constant 0 : index
    %41 = vector.load %arg2[%c0_43, %c0_44] : memref<1x128xf32, #tpu.memory_space<vmem>>, vector<1x128xf32>
    %cst_45 = arith.constant 9.99999974E-6 : f32
    %42 = vector.broadcast %cst_45 : f32 to vector<1x128xf32>
    %43 = arith.addf %40, %42 : vector<1x128xf32>
    %44 = math.rsqrt %43 : vector<1x128xf32>
    %45 = arith.mulf %41, %44 : vector<1x128xf32>
    %c0_46 = arith.constant 0 : index
    %c0_47 = arith.constant 0 : index
    %46 = vector.load %arg3[%c0_46, %c0_47] : memref<1x128xf32, #tpu.memory_space<vmem>>, vector<1x128xf32>
    %47 = arith.mulf %37, %45 : vector<1x128xf32>
    %48 = arith.subf %46, %47 : vector<1x128xf32>
    %49 = vector.broadcast %45 : vector<1x128xf32> to vector<32x128xf32>
    %50 = arith.mulf %26, %49 : vector<32x128xf32>
    %51 = vector.broadcast %48 : vector<1x128xf32> to vector<32x128xf32>
    %52 = arith.addf %50, %51 : vector<32x128xf32>
    %cst_48 = arith.constant 0.000000e+00 : f32
    %53 = vector.broadcast %cst_48 : f32 to vector<32x128xf32>
    %54 = arith.maximumf %52, %53 : vector<32x128xf32>
    %55 = vector.shape_cast %54 : vector<32x128xf32> to vector<2x16x128xf32>
    %c0_49 = arith.constant 0 : index
    %c1_50 = arith.constant 1 : index
    %c0_51 = arith.constant 0 : index
    %56 = vector.load %arg10[%c0_49, %c1_50, %c0_51] : memref<2x18x128xf32, #tpu.memory_space<vmem>>, vector<2x16x128xf32>
    tpu.vector_store %arg10[%c0_49, %c1_50, %c0_51], %55 {strides = array<i32>} : memref<2x18x128xf32, #tpu.memory_space<vmem>>, vector<2x16x128xf32>,
    %cst_52 = arith.constant 0.000000e+00 : f32
    %57 = vector.broadcast %cst_52 : f32 to vector<32x128xf32>
    %c0_53 = arith.constant 0 : index
    %c0_54 = arith.constant 0 : index
    %c0_55 = arith.constant 0 : index
    %58 = vector.load %arg10[%c0_53, %c0_54, %c0_55] : memref<2x18x128xf32, #tpu.memory_space<vmem>>, vector<2x16x128xf32>
    %59 = vector.shape_cast %58 : vector<2x16x128xf32> to vector<32x128xf32>
    %c0_56 = arith.constant 0 : index
    %c0_57 = arith.constant 0 : index
    %c0_58 = arith.constant 0 : index
    %60 = vector.load %arg4[%c0_56, %c0_57, %c0_58] : memref<3x128x128xf32, #tpu.memory_space<vmem>>, vector<1x128x128xf32>
    %61 = vector.shape_cast %60 : vector<1x128x128xf32> to vector<128x128xf32>
    %cst_59 = arith.constant dense<0.000000e+00> : vector<32x128xf32>
    %62 = tpu.matmul %59, %61, %cst_59 {dimension_numbers = #tpu.dot_dimension_numbers<[1], [0], [0], [1], [0, 0, 1, 1], [], []>} : vector<32x128xf32>, vector<128x128xf32>, vector<32x128xf32> -> vector<32x128xf32>
    %63 = arith.addf %57, %62 : vector<32x128xf32>
    %c0_60 = arith.constant 0 : index
    %c1_61 = arith.constant 1 : index
    %c0_62 = arith.constant 0 : index
    %64 = vector.load %arg10[%c0_60, %c1_61, %c0_62] : memref<2x18x128xf32, #tpu.memory_space<vmem>>, vector<2x16x128xf32>
    %65 = vector.shape_cast %64 : vector<2x16x128xf32> to vector<32x128xf32>
    %c1_63 = arith.constant 1 : index
    %c0_64 = arith.constant 0 : index
    %c0_65 = arith.constant 0 : index
    %66 = vector.load %arg4[%c1_63, %c0_64, %c0_65] : memref<3x128x128xf32, #tpu.memory_space<vmem>>, vector<1x128x128xf32>
    %67 = vector.shape_cast %66 : vector<1x128x128xf32> to vector<128x128xf32>
    %cst_66 = arith.constant dense<0.000000e+00> : vector<32x128xf32>
    %68 = tpu.matmul %65, %67, %cst_66 {dimension_numbers = #tpu.dot_dimension_numbers<[1], [0], [0], [1], [0, 0, 1, 1], [], []>} : vector<32x128xf32>, vector<128x128xf32>, vector<32x128xf32> -> vector<32x128xf32>
    %69 = arith.addf %63, %68 : vector<32x128xf32>
    %c0_67 = arith.constant 0 : index
    %c2_68 = arith.constant 2 : index
    %c0_69 = arith.constant 0 : index
    %70 = vector.load %arg10[%c0_67, %c2_68, %c0_69] : memref<2x18x128xf32, #tpu.memory_space<vmem>>, vector<2x16x128xf32>
    %71 = vector.shape_cast %70 : vector<2x16x128xf32> to vector<32x128xf32>
    %c2_70 = arith.constant 2 : index
    %c0_71 = arith.constant 0 : index
    %c0_72 = arith.constant 0 : index
    %72 = vector.load %arg4[%c2_70, %c0_71, %c0_72] : memref<3x128x128xf32, #tpu.memory_space<vmem>>, vector<1x128x128xf32>
    %73 = vector.shape_cast %72 : vector<1x128x128xf32> to vector<128x128xf32>
    %cst_73 = arith.constant dense<0.000000e+00> : vector<32x128xf32>
    %74 = tpu.matmul %71, %73, %cst_73 {dimension_numbers = #tpu.dot_dimension_numbers<[1], [0], [0], [1], [0, 0, 1, 1], [], []>} : vector<32x128xf32>, vector<128x128xf32>, vector<32x128xf32> -> vector<32x128xf32>
    %75 = arith.addf %69, %74 : vector<32x128xf32>
    %cst_74 = arith.constant dense<0.000000e+00> : vector<128xf32>
    %76 = vector.multi_reduction <add>, %75, %cst_74 [0] : vector<32x128xf32> to vector<128xf32>
    %77 = vector.shape_cast %76 : vector<128xf32> to vector<1x128xf32>
    %78 = arith.mulf %75, %75 : vector<32x128xf32>
    %cst_75 = arith.constant dense<0.000000e+00> : vector<128xf32>
    %79 = vector.multi_reduction <add>, %78, %cst_75 [0] : vector<32x128xf32> to vector<128xf32>
    %80 = vector.shape_cast %79 : vector<128xf32> to vector<1x128xf32>
    %81 = tpu.concatenate %77, %80 in 0 : vector<1x128xf32>, vector<1x128xf32> -> vector<2x128xf32>
    %c0_76 = arith.constant 0 : index
    %c0_77 = arith.constant 0 : index
    %82 = vector.load %arg7[%c0_76, %c0_77] : memref<128x128xf32, #tpu.memory_space<vmem>>, vector<128x128xf32>
    %cst_78 = arith.constant dense<0.000000e+00> : vector<2x128xf32>
    %83 = tpu.matmul %81, %82, %cst_78 {dimension_numbers = #tpu.dot_dimension_numbers<[1], [0], [0], [1], [0, 0, 1, 1], [], []>} : vector<2x128xf32>, vector<128x128xf32>, vector<2x128xf32> -> vector<2x128xf32>
    %cst_79 = arith.constant 0.001953125 : f32
    %84 = vector.broadcast %cst_79 : f32 to vector<2x128xf32>
    %85 = arith.mulf %83, %84 : vector<2x128xf32>
    %86 = vector.extract_strided_slice %85 {offsets = [0, 0], sizes = [1, 128], strides = [1, 1]} : vector<2x128xf32> to vector<1x128xf32>
    %87 = vector.extract_strided_slice %85 {offsets = [1, 0], sizes = [1, 128], strides = [1, 1]} : vector<2x128xf32> to vector<1x128xf32>
    %88 = arith.mulf %86, %86 : vector<1x128xf32>
    %89 = arith.subf %87, %88 : vector<1x128xf32>
    %c0_80 = arith.constant 0 : index
    %c0_81 = arith.constant 0 : index
    %90 = vector.load %arg5[%c0_80, %c0_81] : memref<1x128xf32, #tpu.memory_space<vmem>>, vector<1x128xf32>
    %cst_82 = arith.constant 9.99999974E-6 : f32
    %91 = vector.broadcast %cst_82 : f32 to vector<1x128xf32>
    %92 = arith.addf %89, %91 : vector<1x128xf32>
    %93 = math.rsqrt %92 : vector<1x128xf32>
    %94 = arith.mulf %90, %93 : vector<1x128xf32>
    %c0_83 = arith.constant 0 : index
    %c0_84 = arith.constant 0 : index
    %95 = vector.load %arg6[%c0_83, %c0_84] : memref<1x128xf32, #tpu.memory_space<vmem>>, vector<1x128xf32>
    %96 = arith.mulf %86, %94 : vector<1x128xf32>
    %97 = arith.subf %95, %96 : vector<1x128xf32>
    %98 = vector.broadcast %94 : vector<1x128xf32> to vector<32x128xf32>
    %99 = arith.mulf %75, %98 : vector<32x128xf32>
    %100 = vector.broadcast %97 : vector<1x128xf32> to vector<32x128xf32>
    %101 = arith.addf %99, %100 : vector<32x128xf32>
    %102 = vector.shape_cast %6 : vector<2x16x128xf32> to vector<32x128xf32>
    %103 = arith.addf %101, %102 : vector<32x128xf32>
    %cst_85 = arith.constant 0.000000e+00 : f32
    %104 = vector.broadcast %cst_85 : f32 to vector<32x128xf32>
    %105 = arith.maximumf %103, %104 : vector<32x128xf32>
    %c0_86 = arith.constant 0 : index
    %c0_87 = arith.constant 0 : index
    %106 = vector.load %arg8[%c0_86, %c0_87] : memref<32x128xf32, #tpu.memory_space<vmem>>, vector<32x128xf32>
    tpu.vector_store %arg8[%c0_86, %c0_87], %105 {strides = array<i32>} : memref<32x128xf32, #tpu.memory_space<vmem>>, vector<32x128xf32>,
    return
  }
}

</mosaic_0001>

<llo_original>
// kernel: tpu_custom_call.1
$region0: #{tpu_custom_call.1}
  #allocation0 [shape = 'u32[]', space=smem, size = 0x4, offset = 0x4, fixed_abs, tag = 'smem constant byte address 0x4 - core index']
  #allocation1 [shape = 'u32[144,128]{1,0:T(1,128)}', space=vmem, size = 0x12000, scoped, tag = 'internal scratch']
  #allocation2 [shape = 'f32[2,18,128]{2,1,0:T(8,128)}', space=vmem, size = 0x6000, scoped, tag = 'scratch operand']
  #allocation3 [shape = 'f32[2,18,128]{2,1,0:T(8,128)}', space=vmem, size = 0x6000, scoped, tag = 'scratch operand']
  %s0 = inlined_call_operand.hbm [shape: f32[2,16,128], index: 0, kind: input, shape index: {}]
  %s1 = inlined_call_operand.hbm [shape: f32[3,128,128], index: 1, kind: input, shape index: {}]
  %s2 = inlined_call_operand.vmem [shape: f32[1,128], index: 2, kind: input, shape index: {}]
  %s3 = inlined_call_operand.vmem [shape: f32[1,128], index: 3, kind: input, shape index: {}]
  %s4 = inlined_call_operand.hbm [shape: f32[3,128,128], index: 4, kind: input, shape index: {}]
  %s5 = inlined_call_operand.vmem [shape: f32[1,128], index: 5, kind: input, shape index: {}]
  %s6 = inlined_call_operand.vmem [shape: f32[1,128], index: 6, kind: input, shape index: {}]
  %s7 = inlined_call_operand.hbm [shape: f32[128,128], index: 7, kind: input, shape index: {}]
  %s8 = inlined_call_operand.hbm [shape: f32[32,128], index: 8, kind: output, shape index: {}]
  %s9 = sld [smem:[#allocation0]]
  $region58: #{tpu_custom_call.1} parent=0
    _
  %s11 = ssub.s32 1, %s9
  %s12 = scalar_select 0, %s11, %s9
  $region1: #{tpu_custom_call.1} parent=0
    #allocation4 [shape = 'u8[16384]{0}', space=vmem, size = 0x4000, scoped, tag = 'input window, operand 0, single buffered']
    #allocation5 [shape = 's32[1]{0}', space=sflag, size = 0x4, scoped, tag = 'scoped memory for tpu_custom_call.1']
    #allocation6 [shape = 's32[1]{0}', space=sflag, size = 0x4, scoped, tag = 'scoped memory for tpu_custom_call.1']
    #allocation7 [shape = 'u8[196608]{0}', space=vmem, size = 0x30000, scoped, tag = 'input window, operand 1, single buffered']
    #allocation8 [shape = 's32[1]{0}', space=sflag, size = 0x4, scoped, tag = 'scoped memory for tpu_custom_call.1']
    #allocation9 [shape = 'u8[196608]{0}', space=vmem, size = 0x30000, scoped, tag = 'input window, operand 4, single buffered']
    #allocation10 [shape = 'u8[65536]{0}', space=vmem, size = 0x10000, scoped, tag = 'input window, operand 7, single buffered']
    #allocation11 [shape = 's32[1]{0}', space=sflag, size = 0x4, scoped, tag = 'scoped memory for tpu_custom_call.1']
    #allocation12 [shape = 'u8[16384]{0}', space=vmem, size = 0x4000, scoped, tag = 'output window, operand 0, single buffered']
    %13 = vsyncpa [#allocation5], 0
    %14 = vsyncpa [#allocation8], 0
    %15 = vsyncpa [#allocation11], 0
    %16 = vsyncpa [#allocation6], 0
    // Predicated region
    $region2: #{tpu_custom_call.1} parent=1 // pred_check
      _
    $region3: #{tpu_custom_call.1} parent=1 // pred_check_branch
      %18 = sbr.rel (0) target = $region5
    $region4: #{tpu_custom_call.1} parent=1 // pred_region
      %s20 = ssub.s32 512, 512
      %21 = vsyncadd [#allocation5], %s20
      %s22 = sshll.u32 [#allocation4], 4
      %s23 = int_to_ptr.vmem [resolvable:$true] %s22
      %28 = dma.hbm_to_vmem [thread:$0]  %s0, 512, %s23, [#allocation5], 128, 128, 8
    $region5: #{tpu_custom_call.1} parent=1 // pred_fallthru
      _
    // Predicated region
    $region6: #{tpu_custom_call.1} parent=1 // pred_check
      _
    $region7: #{tpu_custom_call.1} parent=1 // pred_check_branch
      %30 = sbr.rel (0) target = $region9
    $region8: #{tpu_custom_call.1} parent=1 // pred_region
      %s32 = ssub.s32 6144, 6144
      %33 = vsyncadd [#allocation8], %s32
      %s34 = sshll.u32 [#allocation7], 4
      %s35 = int_to_ptr.vmem [resolvable:$true] %s34
      %40 = dma.hbm_to_vmem [thread:$0]  %s1, 6144, %s35, [#allocation8], 128, 128, 8
    $region9: #{tpu_custom_call.1} parent=1 // pred_fallthru
      _
    // Predicated region
    $region10: #{tpu_custom_call.1} parent=1 // pred_check
      _
    $region11: #{tpu_custom_call.1} parent=1 // pred_check_branch
      %42 = sbr.rel (0) target = $region13
    $region12: #{tpu_custom_call.1} parent=1 // pred_region
      _
    $region13: #{tpu_custom_call.1} parent=1 // pred_fallthru
      _
    // Predicated region
    $region14: #{tpu_custom_call.1} parent=1 // pred_check
      _
    $region15: #{tpu_custom_call.1} parent=1 // pred_check_branch
      %44 = sbr.rel (0) target = $region17
    $region16: #{tpu_custom_call.1} parent=1 // pred_region
      _
    $region17: #{tpu_custom_call.1} parent=1 // pred_fallthru
      _
    // Predicated region
    $region18: #{tpu_custom_call.1} parent=1 // pred_check
      _
    $region19: #{tpu_custom_call.1} parent=1 // pred_check_branch
      %46 = sbr.rel (0) target = $region21
    $region20: #{tpu_custom_call.1} parent=1 // pred_region
      %s48 = ssub.s32 6144, 6144
      %49 = vsyncadd [#allocation8], %s48
      %s50 = sshll.u32 [#allocation9], 4
      %s51 = int_to_ptr.vmem [resolvable:$true] %s50
      %56 = dma.hbm_to_vmem [thread:$0]  %s4, 6144, %s51, [#allocation8], 128, 128, 8
    $region21: #{tpu_custom_call.1} parent=1 // pred_fallthru
      _
    // Predicated region
    $region22: #{tpu_custom_call.1} parent=1 // pred_check
      _
    $region23: #{tpu_custom_call.1} parent=1 // pred_check_branch
      %58 = sbr.rel (0) target = $region25
    $region24: #{tpu_custom_call.1} parent=1 // pred_region
      _
    $region25: #{tpu_custom_call.1} parent=1 // pred_fallthru
      _
    // Predicated region
    $region26: #{tpu_custom_call.1} parent=1 // pred_check
      _
    $region27: #{tpu_custom_call.1} parent=1 // pred_check_branch
      %60 = sbr.rel (0) target = $region29
    $region28: #{tpu_custom_call.1} parent=1 // pred_region
      _
    $region29: #{tpu_custom_call.1} parent=1 // pred_fallthru
      _
    // Predicated region
    $region30: #{tpu_custom_call.1} parent=1 // pred_check
      _
    $region31: #{tpu_custom_call.1} parent=1 // pred_check_branch
      %62 = sbr.rel (0) target = $region33
    $region32: #{tpu_custom_call.1} parent=1 // pred_region
      %s64 = ssub.s32 2048, 2048
      %65 = vsyncadd [#allocation11], %s64
      %s66 = sshll.u32 [#allocation10], 4
      %s67 = int_to_ptr.vmem [resolvable:$true] %s66
      %72 = dma.hbm_to_vmem [thread:$0]  %s7, 2048, %s67, [#allocation11], 128, 128, 8
    $region33: #{tpu_custom_call.1} parent=1 // pred_fallthru
      _
    // Predicated region
    $region34: #{tpu_custom_call.1} parent=1 // pred_check
      _
    $region35: #{tpu_custom_call.1} parent=1 // pred_check_branch
      %74 = sbr.rel (0) target = $region37
    $region36: #{tpu_custom_call.1} parent=1 // pred_region
      %75 = dma.done [#allocation5], 512
    $region37: #{tpu_custom_call.1} parent=1 // pred_fallthru
      _
    // Predicated region
    $region38: #{tpu_custom_call.1} parent=1 // pred_check
      _
    $region39: #{tpu_custom_call.1} parent=1 // pred_check_branch
      %77 = sbr.rel (0) target = $region41
    $region40: #{tpu_custom_call.1} parent=1 // pred_region
      %78 = dma.done [#allocation8], 6144
    $region41: #{tpu_custom_call.1} parent=1 // pred_fallthru
      _
    // Predicated region
    $region42: #{tpu_custom_call.1} parent=1 // pred_check
      _
    $region43: #{tpu_custom_call.1} parent=1 // pred_check_branch
      %80 = sbr.rel (0) target = $region45
    $region44: #{tpu_custom_call.1} parent=1 // pred_region
      %81 = dma.done [#allocation8], 6144
    $region45: #{tpu_custom_call.1} parent=1 // pred_fallthru
      _
    // Predicated region
    $region46: #{tpu_custom_call.1} parent=1 // pred_check
      _
    $region47: #{tpu_custom_call.1} parent=1 // pred_check_branch
      %83 = sbr.rel (0) target = $region49
    $region48: #{tpu_custom_call.1} parent=1 // pred_region
      %84 = dma.done [#allocation11], 2048
    $region49: #{tpu_custom_call.1} parent=1 // pred_fallthru
      _
    %85 = vst [vmem:[#allocation2] sm:$0x1] 0.0
    %86 = vst [vmem:[#allocation2 + $0x18] sm:$0x1] 0.0
    %87 = vst [vmem:[#allocation2 + $0x11] sm:$0x1] 0.0
    %88 = vst [vmem:[#allocation2 + $0x29] sm:$0x1] 0.0
    %89 = vst [vmem:[#allocation3] sm:$0x1] 0.0
    %90 = vst [vmem:[#allocation3 + $0x18] sm:$0x1] 0.0
    %91 = vst [vmem:[#allocation3 + $0x11] sm:$0x1] 0.0
    %92 = vst [vmem:[#allocation3 + $0x29] sm:$0x1] 0.0
    %v93 = vld [vmem:[#allocation4] sm:$0xff]
    %v94 = vld [vmem:[#allocation4 + $0x8] sm:$0xff]
    %v95 = vld [vmem:[#allocation4 + $0x10] sm:$0xff]
    %v96 = vld [vmem:[#allocation4 + $0x18] sm:$0xff]
    %97 = vst [vmem:[#allocation2 + $0x1] sm:$0xff] %v93
    %98 = vst [vmem:[#allocation2 + $0x9] sm:$0xff] %v94
    %99 = vst [vmem:[#allocation2 + $0x19] sm:$0xff] %v95
    %100 = vst [vmem:[#allocation2 + $0x21] sm:$0xff] %v96
    %v101 = vld [vmem:[#allocation2] sm:$0xff]
    %v102 = vld [vmem:[#allocation2 + $0x8] sm:$0xff]
    %v103 = vld [vmem:[#allocation2 + $0x18] sm:$0xff]
    %v104 = vld [vmem:[#allocation2 + $0x20] sm:$0xff]
    %v105 = vld [vmem:[#allocation7] sm:$0xff]
    %v106 = vld [vmem:[#allocation7 + $0x8] sm:$0xff]
    %v107 = vld [vmem:[#allocation7 + $0x10] sm:$0xff]
    %v108 = vld [vmem:[#allocation7 + $0x18] sm:$0xff]
    %v109 = vld [vmem:[#allocation7 + $0x20] sm:$0xff]
    %v110 = vld [vmem:[#allocation7 + $0x28] sm:$0xff]
    %v111 = vld [vmem:[#allocation7 + $0x30] sm:$0xff]
    %v112 = vld [vmem:[#allocation7 + $0x38] sm:$0xff]
    %v113 = vld [vmem:[#allocation7 + $0x40] sm:$0xff]
    %v114 = vld [vmem:[#allocation7 + $0x48] sm:$0xff]
    %v115 = vld [vmem:[#allocation7 + $0x50] sm:$0xff]
    %v116 = vld [vmem:[#allocation7 + $0x58] sm:$0xff]
    %v117 = vld [vmem:[#allocation7 + $0x60] sm:$0xff]
    %v118 = vld [vmem:[#allocation7 + $0x68] sm:$0xff]
    %v119 = vld [vmem:[#allocation7 + $0x70] sm:$0xff]
    %v120 = vld [vmem:[#allocation7 + $0x78] sm:$0xff]
    %v121 = vld [vmem:[#allocation2 + $0x1] sm:$0xff]
    %v122 = vld [vmem:[#allocation2 + $0x9] sm:$0xff]
    %v123 = vld [vmem:[#allocation2 + $0x19] sm:$0xff]
    %v124 = vld [vmem:[#allocation2 + $0x21] sm:$0xff]
    %s125 = scalar_lea.vmem [#allocation7], 128
    %v126 = vld [vmem:[%s125] sm:$0xff]
    %v127 = vld [vmem:[%s125 + $0x8] sm:$0xff]
    %v128 = vld [vmem:[%s125 + $0x10] sm:$0xff]
    %v129 = vld [vmem:[%s125 + $0x18] sm:$0xff]
    %v130 = vld [vmem:[%s125 + $0x20] sm:$0xff]
    %v131 = vld [vmem:[%s125 + $0x28] sm:$0xff]
    %v132 = vld [vmem:[%s125 + $0x30] sm:$0xff]
    %v133 = vld [vmem:[%s125 + $0x38] sm:$0xff]
    %v134 = vld [vmem:[%s125 + $0x40] sm:$0xff]
    %v135 = vld [vmem:[%s125 + $0x48] sm:$0xff]
    %v136 = vld [vmem:[%s125 + $0x50] sm:$0xff]
    %v137 = vld [vmem:[%s125 + $0x58] sm:$0xff]
    %v138 = vld [vmem:[%s125 + $0x60] sm:$0xff]
    %v139 = vld [vmem:[%s125 + $0x68] sm:$0xff]
    %v140 = vld [vmem:[%s125 + $0x70] sm:$0xff]
    %v141 = vld [vmem:[%s125 + $0x78] sm:$0xff]
    %142 = vmatprep.subr.mxu0 0.0
    %143 = vmatpush1.msra.mxu0 %v126
    %144 = vmatprep.subr.mxu0 0.0
    %145 = vmatpush1.msra.mxu0 %v127
    %146 = vmatprep.subr.mxu0 0.0
    %147 = vmatpush1.msra.mxu0 %v128
    %148 = vmatprep.subr.mxu0 0.0
    %149 = vmatpush1.msra.mxu0 %v129
    %150 = vmatprep.subr.mxu0 0.0
    %151 = vmatpush1.msra.mxu0 %v130
    %152 = vmatprep.subr.mxu0 0.0
    %153 = vmatpush1.msra.mxu0 %v131
    %154 = vmatprep.subr.mxu0 0.0
    %155 = vmatpush1.msra.mxu0 %v132
    %156 = vmatprep.subr.mxu0 0.0
    %157 = vmatpush1.msra.mxu0 %v133
    %158 = vmatprep.subr.mxu0 0.0
    %159 = vmatpush1.msra.mxu0 %v134
    %160 = vmatprep.subr.mxu0 0.0
    %161 = vmatpush1.msra.mxu0 %v135
    %162 = vmatprep.subr.mxu0 0.0
    %163 = vmatpush1.msra.mxu0 %v136
    %164 = vmatprep.subr.mxu0 0.0
    %165 = vmatpush1.msra.mxu0 %v137
    %166 = vmatprep.subr.mxu0 0.0
    %167 = vmatpush1.msra.mxu0 %v138
    %168 = vmatprep.subr.mxu0 0.0
    %169 = vmatpush1.msra.mxu0 %v139
    %170 = vmatprep.subr.mxu0 0.0
    %171 = vmatpush1.msra.mxu0 %v140
    %172 = vmatprep.subr.mxu0 0.0
    %173 = vmatpush1.msra.mxu0 %v141
    %174 = vmatprep.subr.mxu0 0.0
    %175 = vmatpush1.msra.mxu0 0.0
    %176 = vmatprep.subr.mxu0 0.0
    %177 = vmatpush1.msra.mxu0 0.0
    %178 = vmatprep.subr.mxu0 0.0
    %179 = vmatpush1.msra.mxu0 0.0
    %180 = vmatprep.subr.mxu0 0.0
    %181 = vmatpush1.msra.mxu0 0.0
    %182 = vmatprep.subr.mxu0 0.0
    %183 = vmatpush1.msra.mxu0 0.0
    %184 = vmatprep.subr.mxu0 0.0
    %185 = vmatpush1.msra.mxu0 0.0
    %186 = vmatprep.subr.mxu0 0.0
    %187 = vmatpush1.msra.mxu0 0.0
    %188 = vmatprep.subr.mxu0 0.0
    %189 = vmatpush1.msra.mxu0 0.0
    %190 = vmatprep.subr.mxu0 0.0
    %191 = vmatpush1.msra.mxu0 0.0
    %192 = vmatprep.subr.mxu0 0.0
    %193 = vmatpush1.msra.mxu0 0.0
    %194 = vmatprep.subr.mxu0 0.0
    %195 = vmatpush1.msra.mxu0 0.0
    %196 = vmatprep.subr.mxu0 0.0
    %197 = vmatpush1.msra.mxu0 0.0
    %198 = vmatprep.subr.mxu0 0.0
    %199 = vmatpush1.msra.mxu0 0.0
    %200 = vmatprep.subr.mxu0 0.0
    %201 = vmatpush1.msra.mxu0 0.0
    %202 = vmatprep.subr.mxu0 0.0
    %203 = vmatpush1.msra.mxu0 0.0
    %204 = vmatprep.subr.mxu0 0.0
    %205 = vmatpush1.msra.mxu0 0.0
    %206 = vmatprep.mubr.f32.mxu0 0.0
    %207 = vmatmul.mubr.f32.gmra.mrb[0].mxu0 %v121
    %v208 = vpop.f32.mrb[0].mxu0
    %v209 = vadd.f32 0.0, %v208
    %v210 = vpop.f32.mrb[0].mxu0
    %211 = vmatprep.mubr.f32.mxu0 0.0
    %212 = vmatmul.mubr.f32.gmra.mrb[0].mxu0 %v122
    %v213 = vpop.f32.mrb[0].mxu0
    %v214 = vadd.f32 0.0, %v213
    %v215 = vpop.f32.mrb[0].mxu0
    %216 = vmatprep.mubr.f32.mxu0 0.0
    %217 = vmatmul.mubr.f32.gmra.mrb[0].mxu0 %v123
    %v218 = vpop.f32.mrb[0].mxu0
    %v219 = vadd.f32 0.0, %v218
    %v220 = vpop.f32.mrb[0].mxu0
    %221 = vmatprep.mubr.f32.mxu0 0.0
    %222 = vmatmul.mubr.f32.gmra.mrb[0].mxu0 %v124
    %v223 = vpop.f32.mrb[0].mxu0
    %v224 = vadd.f32 0.0, %v223
    %v225 = vpop.f32.mrb[0].mxu0
    %226 = vdwg.mxu0
    %227 = vmatprep.subr.mxu0 0.0
    %228 = vmatpush1.msra.mxu0 %v105
    %229 = vmatprep.subr.mxu0 0.0
    %230 = vmatpush1.msra.mxu0 %v106
    %231 = vmatprep.subr.mxu0 0.0
    %232 = vmatpush1.msra.mxu0 %v107
    %233 = vmatprep.subr.mxu0 0.0
    %234 = vmatpush1.msra.mxu0 %v108
    %235 = vmatprep.subr.mxu0 0.0
    %236 = vmatpush1.msra.mxu0 %v109
    %237 = vmatprep.subr.mxu0 0.0
    %238 = vmatpush1.msra.mxu0 %v110
    %239 = vmatprep.subr.mxu0 0.0
    %240 = vmatpush1.msra.mxu0 %v111
    %241 = vmatprep.subr.mxu0 0.0
    %242 = vmatpush1.msra.mxu0 %v112
    %243 = vmatprep.subr.mxu0 0.0
    %244 = vmatpush1.msra.mxu0 %v113
    %245 = vmatprep.subr.mxu0 0.0
    %246 = vmatpush1.msra.mxu0 %v114
    %247 = vmatprep.subr.mxu0 0.0
    %248 = vmatpush1.msra.mxu0 %v115
    %249 = vmatprep.subr.mxu0 0.0
    %250 = vmatpush1.msra.mxu0 %v116
    %251 = vmatprep.subr.mxu0 0.0
    %252 = vmatpush1.msra.mxu0 %v117
    %253 = vmatprep.subr.mxu0 0.0
    %254 = vmatpush1.msra.mxu0 %v118
    %255 = vmatprep.subr.mxu0 0.0
    %256 = vmatpush1.msra.mxu0 %v119
    %257 = vmatprep.subr.mxu0 0.0
    %258 = vmatpush1.msra.mxu0 %v120
    %259 = vmatprep.subr.mxu0 0.0
    %260 = vmatpush1.msra.mxu0 0.0
    %261 = vmatprep.subr.mxu0 0.0
    %262 = vmatpush1.msra.mxu0 0.0
    %263 = vmatprep.subr.mxu0 0.0
    %264 = vmatpush1.msra.mxu0 0.0
    %265 = vmatprep.subr.mxu0 0.0
    %266 = vmatpush1.msra.mxu0 0.0
    %267 = vmatprep.subr.mxu0 0.0
    %268 = vmatpush1.msra.mxu0 0.0
    %269 = vmatprep.subr.mxu0 0.0
    %270 = vmatpush1.msra.mxu0 0.0
    %271 = vmatprep.subr.mxu0 0.0
    %272 = vmatpush1.msra.mxu0 0.0
    %273 = vmatprep.subr.mxu0 0.0
    %274 = vmatpush1.msra.mxu0 0.0
    %275 = vmatprep.subr.mxu0 0.0
    %276 = vmatpush1.msra.mxu0 0.0
    %277 = vmatprep.subr.mxu0 0.0
    %278 = vmatpush1.msra.mxu0 0.0
    %279 = vmatprep.subr.mxu0 0.0
    %280 = vmatpush1.msra.mxu0 0.0
    %281 = vmatprep.subr.mxu0 0.0
    %282 = vmatpush1.msra.mxu0 0.0
    %283 = vmatprep.subr.mxu0 0.0
    %284 = vmatpush1.msra.mxu0 0.0
    %285 = vmatprep.subr.mxu0 0.0
    %286 = vmatpush1.msra.mxu0 0.0
    %287 = vmatprep.subr.mxu0 0.0
    %288 = vmatpush1.msra.mxu0 0.0
    %289 = vmatprep.subr.mxu0 0.0
    %290 = vmatpush1.msra.mxu0 0.0
    %291 = vmatprep.mubr.f32.mxu0 0.0
    %292 = vmatmul.mubr.f32.gmra.mrb[0].mxu0 %v101
    %v293 = vpop.f32.mrb[0].mxu0
    %v294 = vadd.f32 %v209, %v293
    %v295 = vpop.f32.mrb[0].mxu0
    %296 = vmatprep.mubr.f32.mxu0 0.0
    %297 = vmatmul.mubr.f32.gmra.mrb[0].mxu0 %v102
    %v298 = vpop.f32.mrb[0].mxu0
    %v299 = vadd.f32 %v214, %v298
    %v300 = vpop.f32.mrb[0].mxu0
    %301 = vmatprep.mubr.f32.mxu0 0.0
    %302 = vmatmul.mubr.f32.gmra.mrb[0].mxu0 %v103
    %v303 = vpop.f32.mrb[0].mxu0
    %v304 = vadd.f32 %v219, %v303
    %v305 = vpop.f32.mrb[0].mxu0
    %306 = vmatprep.mubr.f32.mxu0 0.0
    %307 = vmatmul.mubr.f32.gmra.mrb[0].mxu0 %v104
    %v308 = vpop.f32.mrb[0].mxu0
    %v309 = vadd.f32 %v224, %v308
    %v310 = vpop.f32.mrb[0].mxu0
    %311 = vdwg.mxu0
    %v312 = vld [vmem:[#allocation2 + $0x2] sm:$0xff]
    %v313 = vld [vmem:[#allocation2 + $0xa] sm:$0xff]
    %v314 = vld [vmem:[#allocation2 + $0x1a] sm:$0xff]
    %v315 = vld [vmem:[#allocation2 + $0x22] sm:$0xff]
    %s316 = scalar_lea.vmem [#allocation7], 256
    %v317 = vld [vmem:[%s316] sm:$0xff]
    %v318 = vld [vmem:[%s316 + $0x8] sm:$0xff]
    %v319 = vld [vmem:[%s316 + $0x10] sm:$0xff]
    %v320 = vld [vmem:[%s316 + $0x18] sm:$0xff]
    %v321 = vld [vmem:[%s316 + $0x20] sm:$0xff]
    %v322 = vld [vmem:[%s316 + $0x28] sm:$0xff]
    %v323 = vld [vmem:[%s316 + $0x30] sm:$0xff]
    %v324 = vld [vmem:[%s316 + $0x38] sm:$0xff]
    %v325 = vld [vmem:[%s316 + $0x40] sm:$0xff]
    %v326 = vld [vmem:[%s316 + $0x48] sm:$0xff]
    %v327 = vld [vmem:[%s316 + $0x50] sm:$0xff]
    %v328 = vld [vmem:[%s316 + $0x58] sm:$0xff]
    %v329 = vld [vmem:[%s316 + $0x60] sm:$0xff]
    %v330 = vld [vmem:[%s316 + $0x68] sm:$0xff]
    %v331 = vld [vmem:[%s316 + $0x70] sm:$0xff]
    %v332 = vld [vmem:[%s316 + $0x78] sm:$0xff]
    %333 = vmatprep.subr.mxu0 0.0
    %334 = vmatpush1.msra.mxu0 %v317
    %335 = vmatprep.subr.mxu0 0.0
    %336 = vmatpush1.msra.mxu0 %v318
    %337 = vmatprep.subr.mxu0 0.0
    %338 = vmatpush1.msra.mxu0 %v319
    %339 = vmatprep.subr.mxu0 0.0
    %340 = vmatpush1.msra.mxu0 %v320
    %341 = vmatprep.subr.mxu0 0.0
    %342 = vmatpush1.msra.mxu0 %v321
    %343 = vmatprep.subr.mxu0 0.0
    %344 = vmatpush1.msra.mxu0 %v322
    %345 = vmatprep.subr.mxu0 0.0
    %346 = vmatpush1.msra.mxu0 %v323
    %347 = vmatprep.subr.mxu0 0.0
    %348 = vmatpush1.msra.mxu0 %v324
    %349 = vmatprep.subr.mxu0 0.0
    %350 = vmatpush1.msra.mxu0 %v325
    %351 = vmatprep.subr.mxu0 0.0
    %352 = vmatpush1.msra.mxu0 %v326
    %353 = vmatprep.subr.mxu0 0.0
    %354 = vmatpush1.msra.mxu0 %v327
    %355 = vmatprep.subr.mxu0 0.0
    %356 = vmatpush1.msra.mxu0 %v328
    %357 = vmatprep.subr.mxu0 0.0
    %358 = vmatpush1.msra.mxu0 %v329
    %359 = vmatprep.subr.mxu0 0.0
    %360 = vmatpush1.msra.mxu0 %v330
    %361 = vmatprep.subr.mxu0 0.0
    %362 = vmatpush1.msra.mxu0 %v331
    %363 = vmatprep.subr.mxu0 0.0
    %364 = vmatpush1.msra.mxu0 %v332
    %365 = vmatprep.subr.mxu0 0.0
    %366 = vmatpush1.msra.mxu0 0.0
    %367 = vmatprep.subr.mxu0 0.0
    %368 = vmatpush1.msra.mxu0 0.0
    %369 = vmatprep.subr.mxu0 0.0
    %370 = vmatpush1.msra.mxu0 0.0
    %371 = vmatprep.subr.mxu0 0.0
    %372 = vmatpush1.msra.mxu0 0.0
    %373 = vmatprep.subr.mxu0 0.0
    %374 = vmatpush1.msra.mxu0 0.0
    %375 = vmatprep.subr.mxu0 0.0
    %376 = vmatpush1.msra.mxu0 0.0
    %377 = vmatprep.subr.mxu0 0.0
    %378 = vmatpush1.msra.mxu0 0.0
    %379 = vmatprep.subr.mxu0 0.0
    %380 = vmatpush1.msra.mxu0 0.0
    %381 = vmatprep.subr.mxu0 0.0
    %382 = vmatpush1.msra.mxu0 0.0
    %383 = vmatprep.subr.mxu0 0.0
    %384 = vmatpush1.msra.mxu0 0.0
    %385 = vmatprep.subr.mxu0 0.0
    %386 = vmatpush1.msra.mxu0 0.0
    %387 = vmatprep.subr.mxu0 0.0
    %388 = vmatpush1.msra.mxu0 0.0
    %389 = vmatprep.subr.mxu0 0.0
    %390 = vmatpush1.msra.mxu0 0.0
    %391 = vmatprep.subr.mxu0 0.0
    %392 = vmatpush1.msra.mxu0 0.0
    %393 = vmatprep.subr.mxu0 0.0
    %394 = vmatpush1.msra.mxu0 0.0
    %395 = vmatprep.subr.mxu0 0.0
    %396 = vmatpush1.msra.mxu0 0.0
    %397 = vmatprep.mubr.f32.mxu0 0.0
    %398 = vmatmul.mubr.f32.gmra.mrb[0].mxu0 %v312
    %v399 = vpop.f32.mrb[0].mxu0
    %v400 = vadd.f32 0.0, %v399
    %v401 = vpop.f32.mrb[0].mxu0
    %402 = vmatprep.mubr.f32.mxu0 0.0
    %403 = vmatmul.mubr.f32.gmra.mrb[0].mxu0 %v313
    %v404 = vpop.f32.mrb[0].mxu0
    %v405 = vadd.f32 0.0, %v404
    %v406 = vpop.f32.mrb[0].mxu0
    %407 = vmatprep.mubr.f32.mxu0 0.0
    %408 = vmatmul.mubr.f32.gmra.mrb[0].mxu0 %v314
    %v409 = vpop.f32.mrb[0].mxu0
    %v410 = vadd.f32 0.0, %v409
    %v411 = vpop.f32.mrb[0].mxu0
    %412 = vmatprep.mubr.f32.mxu0 0.0
    %413 = vmatmul.mubr.f32.gmra.mrb[0].mxu0 %v315
    %v414 = vpop.f32.mrb[0].mxu0
    %v415 = vadd.f32 0.0, %v414
    %v416 = vpop.f32.mrb[0].mxu0
    %417 = vdwg.mxu0
    %v418 = vadd.f32 %v294, %v400
    %v419 = vadd.f32 %v299, %v405
    %v420 = vadd.f32 %v304, %v410
    %v421 = vadd.f32 %v309, %v415
    %v422 = vadd.f32 %v418, %v419
    %v423 = vadd.f32 %v422, %v420
    %v424 = vadd.f32 %v423, %v421
    %v425 = vrot.slane %v424, 4
    %v426 = vadd.f32 %v424, %v425
    %v427 = vrot.slane %v426, 2
    %v428 = vadd.f32 %v426, %v427
    %v429 = vrot.slane %v428, 1
    %v430 = vadd.f32 %v428, %v429
    %v431 = vmul.f32 %v418, %v418
    %v432 = vmul.f32 %v419, %v419
    %v433 = vmul.f32 %v420, %v420
    %v434 = vmul.f32 %v421, %v421
    %v435 = vadd.f32 %v431, %v432
    %v436 = vadd.f32 %v435, %v433
    %v437 = vadd.f32 %v436, %v434
    %v438 = vrot.slane %v437, 4
    %v439 = vadd.f32 %v437, %v438
    %v440 = vrot.slane %v439, 2
    %v441 = vadd.f32 %v439, %v440
    %v442 = vrot.slane %v441, 1
    %v443 = vadd.f32 %v441, %v442
    %vm444 = vcmask 1040384
    %v445 = vsel %vm444, %v430, %v443
    %v446 = vld [vmem:[#allocation10] sm:$0xff]
    %v447 = vld [vmem:[#allocation10 + $0x8] sm:$0xff]
    %v448 = vld [vmem:[#allocation10 + $0x10] sm:$0xff]
    %v449 = vld [vmem:[#allocation10 + $0x18] sm:$0xff]
    %v450 = vld [vmem:[#allocation10 + $0x20] sm:$0xff]
    %v451 = vld [vmem:[#allocation10 + $0x28] sm:$0xff]
    %v452 = vld [vmem:[#allocation10 + $0x30] sm:$0xff]
    %v453 = vld [vmem:[#allocation10 + $0x38] sm:$0xff]
    %v454 = vld [vmem:[#allocation10 + $0x40] sm:$0xff]
    %v455 = vld [vmem:[#allocation10 + $0x48] sm:$0xff]
    %v456 = vld [vmem:[#allocation10 + $0x50] sm:$0xff]
    %v457 = vld [vmem:[#allocation10 + $0x58] sm:$0xff]
    %v458 = vld [vmem:[#allocation10 + $0x60] sm:$0xff]
    %v459 = vld [vmem:[#allocation10 + $0x68] sm:$0xff]
    %v460 = vld [vmem:[#allocation10 + $0x70] sm:$0xff]
    %v461 = vld [vmem:[#allocation10 + $0x78] sm:$0xff]
    %462 = vmatprep.subr.mxu0 0.0
    %463 = vmatpush1.msra.mxu0 %v446
    %464 = vmatprep.subr.mxu0 0.0
    %465 = vmatpush1.msra.mxu0 %v447
    %466 = vmatprep.subr.mxu0 0.0
    %467 = vmatpush1.msra.mxu0 %v448
    %468 = vmatprep.subr.mxu0 0.0
    %469 = vmatpush1.msra.mxu0 %v449
    %470 = vmatprep.subr.mxu0 0.0
    %471 = vmatpush1.msra.mxu0 %v450
    %472 = vmatprep.subr.mxu0 0.0
    %473 = vmatpush1.msra.mxu0 %v451
    %474 = vmatprep.subr.mxu0 0.0
    %475 = vmatpush1.msra.mxu0 %v452
    %476 = vmatprep.subr.mxu0 0.0
    %477 = vmatpush1.msra.mxu0 %v453
    %478 = vmatprep.subr.mxu0 0.0
    %479 = vmatpush1.msra.mxu0 %v454
    %480 = vmatprep.subr.mxu0 0.0
    %481 = vmatpush1.msra.mxu0 %v455
    %482 = vmatprep.subr.mxu0 0.0
    %483 = vmatpush1.msra.mxu0 %v456
    %484 = vmatprep.subr.mxu0 0.0
    %485 = vmatpush1.msra.mxu0 %v457
    %486 = vmatprep.subr.mxu0 0.0
    %487 = vmatpush1.msra.mxu0 %v458
    %488 = vmatprep.subr.mxu0 0.0
    %489 = vmatpush1.msra.mxu0 %v459
    %490 = vmatprep.subr.mxu0 0.0
    %491 = vmatpush1.msra.mxu0 %v460
    %492 = vmatprep.subr.mxu0 0.0
    %493 = vmatpush1.msra.mxu0 %v461
    %494 = vmatprep.subr.mxu0 0.0
    %495 = vmatpush1.msra.mxu0 0.0
    %496 = vmatprep.subr.mxu0 0.0
    %497 = vmatpush1.msra.mxu0 0.0
    %498 = vmatprep.subr.mxu0 0.0
    %499 = vmatpush1.msra.mxu0 0.0
    %500 = vmatprep.subr.mxu0 0.0
    %501 = vmatpush1.msra.mxu0 0.0
    %502 = vmatprep.subr.mxu0 0.0
    %503 = vmatpush1.msra.mxu0 0.0
    %504 = vmatprep.subr.mxu0 0.0
    %505 = vmatpush1.msra.mxu0 0.0
    %506 = vmatprep.subr.mxu0 0.0
    %507 = vmatpush1.msra.mxu0 0.0
    %508 = vmatprep.subr.mxu0 0.0
    %509 = vmatpush1.msra.mxu0 0.0
    %510 = vmatprep.subr.mxu0 0.0
    %511 = vmatpush1.msra.mxu0 0.0
    %512 = vmatprep.subr.mxu0 0.0
    %513 = vmatpush1.msra.mxu0 0.0
    %514 = vmatprep.subr.mxu0 0.0
    %515 = vmatpush1.msra.mxu0 0.0
    %516 = vmatprep.subr.mxu0 0.0
    %517 = vmatpush1.msra.mxu0 0.0
    %518 = vmatprep.subr.mxu0 0.0
    %519 = vmatpush1.msra.mxu0 0.0
    %520 = vmatprep.subr.mxu0 0.0
    %521 = vmatpush1.msra.mxu0 0.0
    %522 = vmatprep.subr.mxu0 0.0
    %523 = vmatpush1.msra.mxu0 0.0
    %524 = vmatprep.subr.mxu0 0.0
    %525 = vmatpush1.msra.mxu0 0.0
    %526 = vmatprep.mubr.f32.mxu0 0.0
    %527 = vmatmul.mubr.f32.gmra.mrb[0].mxu0 %v445
    %v528 = vpop.f32.mrb[0].mxu0
    %v529 = vadd.f32 0.0, %v528
    %v530 = vpop.f32.mrb[0].mxu0
    %531 = vdwg.mxu0
    %v532 = vmul.f32 %v529, 0.001953125
    %v533 = vmul.f32 %v532, %v532
    %v535 = vrot.slane %v533, 7
    %v537 = vsub.f32 %v532, %v535
    %v538 = vld [vmem:[%s2] sm:$0x1]
    %v539 = vadd.f32 %v537, 1e-05
    %v540 = vrsqrt.pop %v539
    %v543 = vunpack.c.l.s4 1966171168
    %v544 = vunpack.c.0.s8 %v543
    %v545 = vlaneseq
    %v546 = vshrl.u32 %v545, 7
    %v547 = vsub.s32 %v544, %v546
    %v548 = vrot.slane %v540, %v547
    %v549 = vcombine.high %v548, %v548
    %v551 = vunpack.c.l.s4 1966171168
    %v552 = vunpack.c.0.s8 %v551
    %v553 = vlaneseq
    %v554 = vshrl.u32 %v553, 7
    %v555 = vsub.s32 %v552, %v554
    %v556 = vrot.slane %v549, %v555
    %v558 = vmul.f32 %v538, %v556
    %v559 = vld [vmem:[%s3] sm:$0x1]
    %v560 = vmul.f32 %v532, %v558
    %v561 = vsub.f32 %v559, %v560
    %v563 = vlaneseq
    %v564 = vshrl.u32 %v563, 7
    %v565 = vsub.s32 0, %v564
    %v566 = vrot.slane %v558, %v565
    %v568 = vmul.f32 %v418, %v566
    %v569 = vmul.f32 %v419, %v566
    %v570 = vmul.f32 %v420, %v566
    %v571 = vmul.f32 %v421, %v566
    %v573 = vlaneseq
    %v574 = vshrl.u32 %v573, 7
    %v575 = vsub.s32 0, %v574
    %v576 = vrot.slane %v561, %v575
    %v578 = vadd.f32 %v568, %v576
    %v579 = vadd.f32 %v569, %v576
    %v580 = vadd.f32 %v570, %v576
    %v581 = vadd.f32 %v571, %v576
    %v582 = vmax.f32 %v578, 0.0
    %v583 = vmax.f32 %v579, 0.0
    %v584 = vmax.f32 %v580, 0.0
    %v585 = vmax.f32 %v581, 0.0
    %586 = vst [vmem:[#allocation3 + $0x1] sm:$0xff] %v582
    %587 = vst [vmem:[#allocation3 + $0x9] sm:$0xff] %v583
    %588 = vst [vmem:[#allocation3 + $0x19] sm:$0xff] %v584
    %589 = vst [vmem:[#allocation3 + $0x21] sm:$0xff] %v585
    %v590 = vld [vmem:[#allocation3] sm:$0xff]
    %v591 = vld [vmem:[#allocation3 + $0x8] sm:$0xff]
    %v592 = vld [vmem:[#allocation3 + $0x18] sm:$0xff]
    %v593 = vld [vmem:[#allocation3 + $0x20] sm:$0xff]
    %v594 = vld [vmem:[#allocation9] sm:$0xff]
    %v595 = vld [vmem:[#allocation9 + $0x8] sm:$0xff]
    %v596 = vld [vmem:[#allocation9 + $0x10] sm:$0xff]
    %v597 = vld [vmem:[#allocation9 + $0x18] sm:$0xff]
    %v598 = vld [vmem:[#allocation9 + $0x20] sm:$0xff]
    %v599 = vld [vmem:[#allocation9 + $0x28] sm:$0xff]
    %v600 = vld [vmem:[#allocation9 + $0x30] sm:$0xff]
    %v601 = vld [vmem:[#allocation9 + $0x38] sm:$0xff]
    %v602 = vld [vmem:[#allocation9 + $0x40] sm:$0xff]
    %v603 = vld [vmem:[#allocation9 + $0x48] sm:$0xff]
    %v604 = vld [vmem:[#allocation9 + $0x50] sm:$0xff]
    %v605 = vld [vmem:[#allocation9 + $0x58] sm:$0xff]
    %v606 = vld [vmem:[#allocation9 + $0x60] sm:$0xff]
    %v607 = vld [vmem:[#allocation9 + $0x68] sm:$0xff]
    %v608 = vld [vmem:[#allocation9 + $0x70] sm:$0xff]
    %v609 = vld [vmem:[#allocation9 + $0x78] sm:$0xff]
    %v610 = vld [vmem:[#allocation3 + $0x1] sm:$0xff]
    %v611 = vld [vmem:[#allocation3 + $0x9] sm:$0xff]
    %v612 = vld [vmem:[#allocation3 + $0x19] sm:$0xff]
    %v613 = vld [vmem:[#allocation3 + $0x21] sm:$0xff]
    %s614 = scalar_lea.vmem [#allocation9], 128
    %v615 = vld [vmem:[%s614] sm:$0xff]
    %v616 = vld [vmem:[%s614 + $0x8] sm:$0xff]
    %v617 = vld [vmem:[%s614 + $0x10] sm:$0xff]
    %v618 = vld [vmem:[%s614 + $0x18] sm:$0xff]
    %v619 = vld [vmem:[%s614 + $0x20] sm:$0xff]
    %v620 = vld [vmem:[%s614 + $0x28] sm:$0xff]
    %v621 = vld [vmem:[%s614 + $0x30] sm:$0xff]
    %v622 = vld [vmem:[%s614 + $0x38] sm:$0xff]
    %v623 = vld [vmem:[%s614 + $0x40] sm:$0xff]
    %v624 = vld [vmem:[%s614 + $0x48] sm:$0xff]
    %v625 = vld [vmem:[%s614 + $0x50] sm:$0xff]
    %v626 = vld [vmem:[%s614 + $0x58] sm:$0xff]
    %v627 = vld [vmem:[%s614 + $0x60] sm:$0xff]
    %v628 = vld [vmem:[%s614 + $0x68] sm:$0xff]
    %v629 = vld [vmem:[%s614 + $0x70] sm:$0xff]
    %v630 = vld [vmem:[%s614 + $0x78] sm:$0xff]
    %631 = vmatprep.subr.mxu0 0.0
    %632 = vmatpush1.msra.mxu0 %v615
    %633 = vmatprep.subr.mxu0 0.0
    %634 = vmatpush1.msra.mxu0 %v616
    %635 = vmatprep.subr.mxu0 0.0
    %636 = vmatpush1.msra.mxu0 %v617
    %637 = vmatprep.subr.mxu0 0.0
    %638 = vmatpush1.msra.mxu0 %v618
    %639 = vmatprep.subr.mxu0 0.0
    %640 = vmatpush1.msra.mxu0 %v619
    %641 = vmatprep.subr.mxu0 0.0
    %642 = vmatpush1.msra.mxu0 %v620
    %643 = vmatprep.subr.mxu0 0.0
    %644 = vmatpush1.msra.mxu0 %v621
    %645 = vmatprep.subr.mxu0 0.0
    %646 = vmatpush1.msra.mxu0 %v622
    %647 = vmatprep.subr.mxu0 0.0
    %648 = vmatpush1.msra.mxu0 %v623
    %649 = vmatprep.subr.mxu0 0.0
    %650 = vmatpush1.msra.mxu0 %v624
    %651 = vmatprep.subr.mxu0 0.0
    %652 = vmatpush1.msra.mxu0 %v625
    %653 = vmatprep.subr.mxu0 0.0
    %654 = vmatpush1.msra.mxu0 %v626
    %655 = vmatprep.subr.mxu0 0.0
    %656 = vmatpush1.msra.mxu0 %v627
    %657 = vmatprep.subr.mxu0 0.0
    %658 = vmatpush1.msra.mxu0 %v628
    %659 = vmatprep.subr.mxu0 0.0
    %660 = vmatpush1.msra.mxu0 %v629
    %661 = vmatprep.subr.mxu0 0.0
    %662 = vmatpush1.msra.mxu0 %v630
    %663 = vmatprep.subr.mxu0 0.0
    %664 = vmatpush1.msra.mxu0 0.0
    %665 = vmatprep.subr.mxu0 0.0
    %666 = vmatpush1.msra.mxu0 0.0
    %667 = vmatprep.subr.mxu0 0.0
    %668 = vmatpush1.msra.mxu0 0.0
    %669 = vmatprep.subr.mxu0 0.0
    %670 = vmatpush1.msra.mxu0 0.0
    %671 = vmatprep.subr.mxu0 0.0
    %672 = vmatpush1.msra.mxu0 0.0
    %673 = vmatprep.subr.mxu0 0.0
    %674 = vmatpush1.msra.mxu0 0.0
    %675 = vmatprep.subr.mxu0 0.0
    %676 = vmatpush1.msra.mxu0 0.0
    %677 = vmatprep.subr.mxu0 0.0
    %678 = vmatpush1.msra.mxu0 0.0
    %679 = vmatprep.subr.mxu0 0.0
    %680 = vmatpush1.msra.mxu0 0.0
    %681 = vmatprep.subr.mxu0 0.0
    %682 = vmatpush1.msra.mxu0 0.0
    %683 = vmatprep.subr.mxu0 0.0
    %684 = vmatpush1.msra.mxu0 0.0
    %685 = vmatprep.subr.mxu0 0.0
    %686 = vmatpush1.msra.mxu0 0.0
    %687 = vmatprep.subr.mxu0 0.0
    %688 = vmatpush1.msra.mxu0 0.0
    %689 = vmatprep.subr.mxu0 0.0
    %690 = vmatpush1.msra.mxu0 0.0
    %691 = vmatprep.subr.mxu0 0.0
    %692 = vmatpush1.msra.mxu0 0.0
    %693 = vmatprep.subr.mxu0 0.0
    %694 = vmatpush1.msra.mxu0 0.0
    %695 = vmatprep.mubr.f32.mxu0 0.0
    %696 = vmatmul.mubr.f32.gmra.mrb[0].mxu0 %v610
    %v697 = vpop.f32.mrb[0].mxu0
    %v698 = vadd.f32 0.0, %v697
    %v699 = vpop.f32.mrb[0].mxu0
    %700 = vmatprep.mubr.f32.mxu0 0.0
    %701 = vmatmul.mubr.f32.gmra.mrb[0].mxu0 %v611
    %v702 = vpop.f32.mrb[0].mxu0
    %v703 = vadd.f32 0.0, %v702
    %v704 = vpop.f32.mrb[0].mxu0
    %705 = vmatprep.mubr.f32.mxu0 0.0
    %706 = vmatmul.mubr.f32.gmra.mrb[0].mxu0 %v612
    %v707 = vpop.f32.mrb[0].mxu0
    %v708 = vadd.f32 0.0, %v707
    %v709 = vpop.f32.mrb[0].mxu0
    %710 = vmatprep.mubr.f32.mxu0 0.0
    %711 = vmatmul.mubr.f32.gmra.mrb[0].mxu0 %v613
    %v712 = vpop.f32.mrb[0].mxu0
    %v713 = vadd.f32 0.0, %v712
    %v714 = vpop.f32.mrb[0].mxu0
    %715 = vdwg.mxu0
    %716 = vmatprep.subr.mxu0 0.0
    %717 = vmatpush1.msra.mxu0 %v594
    %718 = vmatprep.subr.mxu0 0.0
    %719 = vmatpush1.msra.mxu0 %v595
    %720 = vmatprep.subr.mxu0 0.0
    %721 = vmatpush1.msra.mxu0 %v596
    %722 = vmatprep.subr.mxu0 0.0
    %723 = vmatpush1.msra.mxu0 %v597
    %724 = vmatprep.subr.mxu0 0.0
    %725 = vmatpush1.msra.mxu0 %v598
    %726 = vmatprep.subr.mxu0 0.0
    %727 = vmatpush1.msra.mxu0 %v599
    %728 = vmatprep.subr.mxu0 0.0
    %729 = vmatpush1.msra.mxu0 %v600
    %730 = vmatprep.subr.mxu0 0.0
    %731 = vmatpush1.msra.mxu0 %v601
    %732 = vmatprep.subr.mxu0 0.0
    %733 = vmatpush1.msra.mxu0 %v602
    %734 = vmatprep.subr.mxu0 0.0
    %735 = vmatpush1.msra.mxu0 %v603
    %736 = vmatprep.subr.mxu0 0.0
    %737 = vmatpush1.msra.mxu0 %v604
    %738 = vmatprep.subr.mxu0 0.0
    %739 = vmatpush1.msra.mxu0 %v605
    %740 = vmatprep.subr.mxu0 0.0
    %741 = vmatpush1.msra.mxu0 %v606
    %742 = vmatprep.subr.mxu0 0.0
    %743 = vmatpush1.msra.mxu0 %v607
    %744 = vmatprep.subr.mxu0 0.0
    %745 = vmatpush1.msra.mxu0 %v608
    %746 = vmatprep.subr.mxu0 0.0
    %747 = vmatpush1.msra.mxu0 %v609
    %748 = vmatprep.subr.mxu0 0.0
    %749 = vmatpush1.msra.mxu0 0.0
    %750 = vmatprep.subr.mxu0 0.0
    %751 = vmatpush1.msra.mxu0 0.0
    %752 = vmatprep.subr.mxu0 0.0
    %753 = vmatpush1.msra.mxu0 0.0
    %754 = vmatprep.subr.mxu0 0.0
    %755 = vmatpush1.msra.mxu0 0.0
    %756 = vmatprep.subr.mxu0 0.0
    %757 = vmatpush1.msra.mxu0 0.0
    %758 = vmatprep.subr.mxu0 0.0
    %759 = vmatpush1.msra.mxu0 0.0
    %760 = vmatprep.subr.mxu0 0.0
    %761 = vmatpush1.msra.mxu0 0.0
    %762 = vmatprep.subr.mxu0 0.0
    %763 = vmatpush1.msra.mxu0 0.0
    %764 = vmatprep.subr.mxu0 0.0
    %765 = vmatpush1.msra.mxu0 0.0
    %766 = vmatprep.subr.mxu0 0.0
    %767 = vmatpush1.msra.mxu0 0.0
    %768 = vmatprep.subr.mxu0 0.0
    %769 = vmatpush1.msra.mxu0 0.0
    %770 = vmatprep.subr.mxu0 0.0
    %771 = vmatpush1.msra.mxu0 0.0
    %772 = vmatprep.subr.mxu0 0.0
    %773 = vmatpush1.msra.mxu0 0.0
    %774 = vmatprep.subr.mxu0 0.0
    %775 = vmatpush1.msra.mxu0 0.0
    %776 = vmatprep.subr.mxu0 0.0
    %777 = vmatpush1.msra.mxu0 0.0
    %778 = vmatprep.subr.mxu0 0.0
    %779 = vmatpush1.msra.mxu0 0.0
    %780 = vmatprep.mubr.f32.mxu0 0.0
    %781 = vmatmul.mubr.f32.gmra.mrb[0].mxu0 %v590
    %v782 = vpop.f32.mrb[0].mxu0
    %v783 = vadd.f32 %v698, %v782
    %v784 = vpop.f32.mrb[0].mxu0
    %785 = vmatprep.mubr.f32.mxu0 0.0
    %786 = vmatmul.mubr.f32.gmra.mrb[0].mxu0 %v591
    %v787 = vpop.f32.mrb[0].mxu0
    %v788 = vadd.f32 %v703, %v787
    %v789 = vpop.f32.mrb[0].mxu0
    %790 = vmatprep.mubr.f32.mxu0 0.0
    %791 = vmatmul.mubr.f32.gmra.mrb[0].mxu0 %v592
    %v792 = vpop.f32.mrb[0].mxu0
    %v793 = vadd.f32 %v708, %v792
    %v794 = vpop.f32.mrb[0].mxu0
    %795 = vmatprep.mubr.f32.mxu0 0.0
    %796 = vmatmul.mubr.f32.gmra.mrb[0].mxu0 %v593
    %v797 = vpop.f32.mrb[0].mxu0
    %v798 = vadd.f32 %v713, %v797
    %v799 = vpop.f32.mrb[0].mxu0
    %800 = vdwg.mxu0
    %v801 = vld [vmem:[#allocation3 + $0x2] sm:$0xff]
    %v802 = vld [vmem:[#allocation3 + $0xa] sm:$0xff]
    %v803 = vld [vmem:[#allocation3 + $0x1a] sm:$0xff]
    %v804 = vld [vmem:[#allocation3 + $0x22] sm:$0xff]
    %s805 = scalar_lea.vmem [#allocation9], 256
    %v806 = vld [vmem:[%s805] sm:$0xff]
    %v807 = vld [vmem:[%s805 + $0x8] sm:$0xff]
    %v808 = vld [vmem:[%s805 + $0x10] sm:$0xff]
    %v809 = vld [vmem:[%s805 + $0x18] sm:$0xff]
    %v810 = vld [vmem:[%s805 + $0x20] sm:$0xff]
    %v811 = vld [vmem:[%s805 + $0x28] sm:$0xff]
    %v812 = vld [vmem:[%s805 + $0x30] sm:$0xff]
    %v813 = vld [vmem:[%s805 + $0x38] sm:$0xff]
    %v814 = vld [vmem:[%s805 + $0x40] sm:$0xff]
    %v815 = vld [vmem:[%s805 + $0x48] sm:$0xff]
    %v816 = vld [vmem:[%s805 + $0x50] sm:$0xff]
    %v817 = vld [vmem:[%s805 + $0x58] sm:$0xff]
    %v818 = vld [vmem:[%s805 + $0x60] sm:$0xff]
    %v819 = vld [vmem:[%s805 + $0x68] sm:$0xff]
    %v820 = vld [vmem:[%s805 + $0x70] sm:$0xff]
    %v821 = vld [vmem:[%s805 + $0x78] sm:$0xff]
    %822 = vmatprep.subr.mxu0 0.0
    %823 = vmatpush1.msra.mxu0 %v806
    %824 = vmatprep.subr.mxu0 0.0
    %825 = vmatpush1.msra.mxu0 %v807
    %826 = vmatprep.subr.mxu0 0.0
    %827 = vmatpush1.msra.mxu0 %v808
    %828 = vmatprep.subr.mxu0 0.0
    %829 = vmatpush1.msra.mxu0 %v809
    %830 = vmatprep.subr.mxu0 0.0
    %831 = vmatpush1.msra.mxu0 %v810
    %832 = vmatprep.subr.mxu0 0.0
    %833 = vmatpush1.msra.mxu0 %v811
    %834 = vmatprep.subr.mxu0 0.0
    %835 = vmatpush1.msra.mxu0 %v812
    %836 = vmatprep.subr.mxu0 0.0
    %837 = vmatpush1.msra.mxu0 %v813
    %838 = vmatprep.subr.mxu0 0.0
    %839 = vmatpush1.msra.mxu0 %v814
    %840 = vmatprep.subr.mxu0 0.0
    %841 = vmatpush1.msra.mxu0 %v815
    %842 = vmatprep.subr.mxu0 0.0
    %843 = vmatpush1.msra.mxu0 %v816
    %844 = vmatprep.subr.mxu0 0.0
    %845 = vmatpush1.msra.mxu0 %v817
    %846 = vmatprep.subr.mxu0 0.0
    %847 = vmatpush1.msra.mxu0 %v818
    %848 = vmatprep.subr.mxu0 0.0
    %849 = vmatpush1.msra.mxu0 %v819
    %850 = vmatprep.subr.mxu0 0.0
    %851 = vmatpush1.msra.mxu0 %v820
    %852 = vmatprep.subr.mxu0 0.0
    %853 = vmatpush1.msra.mxu0 %v821
    %854 = vmatprep.subr.mxu0 0.0
    %855 = vmatpush1.msra.mxu0 0.0
    %856 = vmatprep.subr.mxu0 0.0
    %857 = vmatpush1.msra.mxu0 0.0
    %858 = vmatprep.subr.mxu0 0.0
    %859 = vmatpush1.msra.mxu0 0.0
    %860 = vmatprep.subr.mxu0 0.0
    %861 = vmatpush1.msra.mxu0 0.0
    %862 = vmatprep.subr.mxu0 0.0
    %863 = vmatpush1.msra.mxu0 0.0
    %864 = vmatprep.subr.mxu0 0.0
    %865 = vmatpush1.msra.mxu0 0.0
    %866 = vmatprep.subr.mxu0 0.0
    %867 = vmatpush1.msra.mxu0 0.0
    %868 = vmatprep.subr.mxu0 0.0
    %869 = vmatpush1.msra.mxu0 0.0
    %870 = vmatprep.subr.mxu0 0.0
    %871 = vmatpush1.msra.mxu0 0.0
    %872 = vmatprep.subr.mxu0 0.0
    %873 = vmatpush1.msra.mxu0 0.0
    %874 = vmatprep.subr.mxu0 0.0
    %875 = vmatpush1.msra.mxu0 0.0
    %876 = vmatprep.subr.mxu0 0.0
    %877 = vmatpush1.msra.mxu0 0.0
    %878 = vmatprep.subr.mxu0 0.0
    %879 = vmatpush1.msra.mxu0 0.0
    %880 = vmatprep.subr.mxu0 0.0
    %881 = vmatpush1.msra.mxu0 0.0
    %882 = vmatprep.subr.mxu0 0.0
    %883 = vmatpush1.msra.mxu0 0.0
    %884 = vmatprep.subr.mxu0 0.0
    %885 = vmatpush1.msra.mxu0 0.0
    %886 = vmatprep.mubr.f32.mxu0 0.0
    %887 = vmatmul.mubr.f32.gmra.mrb[0].mxu0 %v801
    %v888 = vpop.f32.mrb[0].mxu0
    %v889 = vadd.f32 0.0, %v888
    %v890 = vpop.f32.mrb[0].mxu0
    %891 = vmatprep.mubr.f32.mxu0 0.0
    %892 = vmatmul.mubr.f32.gmra.mrb[0].mxu0 %v802
    %v893 = vpop.f32.mrb[0].mxu0
    %v894 = vadd.f32 0.0, %v893
    %v895 = vpop.f32.mrb[0].mxu0
    %896 = vmatprep.mubr.f32.mxu0 0.0
    %897 = vmatmul.mubr.f32.gmra.mrb[0].mxu0 %v803
    %v898 = vpop.f32.mrb[0].mxu0
    %v899 = vadd.f32 0.0, %v898
    %v900 = vpop.f32.mrb[0].mxu0
    %901 = vmatprep.mubr.f32.mxu0 0.0
    %902 = vmatmul.mubr.f32.gmra.mrb[0].mxu0 %v804
    %v903 = vpop.f32.mrb[0].mxu0
    %v904 = vadd.f32 0.0, %v903
    %v905 = vpop.f32.mrb[0].mxu0
    %906 = vdwg.mxu0
    %v907 = vadd.f32 %v783, %v889
    %v908 = vadd.f32 %v788, %v894
    %v909 = vadd.f32 %v793, %v899
    %v910 = vadd.f32 %v798, %v904
    %v911 = vadd.f32 %v907, %v908
    %v912 = vadd.f32 %v911, %v909
    %v913 = vadd.f32 %v912, %v910
    %v914 = vrot.slane %v913, 4
    %v915 = vadd.f32 %v913, %v914
    %v916 = vrot.slane %v915, 2
    %v917 = vadd.f32 %v915, %v916
    %v918 = vrot.slane %v917, 1
    %v919 = vadd.f32 %v917, %v918
    %v920 = vmul.f32 %v907, %v907
    %v921 = vmul.f32 %v908, %v908
    %v922 = vmul.f32 %v909, %v909
    %v923 = vmul.f32 %v910, %v910
    %v924 = vadd.f32 %v920, %v921
    %v925 = vadd.f32 %v924, %v922
    %v926 = vadd.f32 %v925, %v923
    %v927 = vrot.slane %v926, 4
    %v928 = vadd.f32 %v926, %v927
    %v929 = vrot.slane %v928, 2
    %v930 = vadd.f32 %v928, %v929
    %v931 = vrot.slane %v930, 1
    %v932 = vadd.f32 %v930, %v931
    %v933 = vsel %vm444, %v919, %v932
    %v934 = vld [vmem:[#allocation10] sm:$0xff]
    %v935 = vld [vmem:[#allocation10 + $0x8] sm:$0xff]
    %v936 = vld [vmem:[#allocation10 + $0x10] sm:$0xff]
    %v937 = vld [vmem:[#allocation10 + $0x18] sm:$0xff]
    %v938 = vld [vmem:[#allocation10 + $0x20] sm:$0xff]
    %v939 = vld [vmem:[#allocation10 + $0x28] sm:$0xff]
    %v940 = vld [vmem:[#allocation10 + $0x30] sm:$0xff]
    %v941 = vld [vmem:[#allocation10 + $0x38] sm:$0xff]
    %v942 = vld [vmem:[#allocation10 + $0x40] sm:$0xff]
    %v943 = vld [vmem:[#allocation10 + $0x48] sm:$0xff]
    %v944 = vld [vmem:[#allocation10 + $0x50] sm:$0xff]
    %v945 = vld [vmem:[#allocation10 + $0x58] sm:$0xff]
    %v946 = vld [vmem:[#allocation10 + $0x60] sm:$0xff]
    %v947 = vld [vmem:[#allocation10 + $0x68] sm:$0xff]
    %v948 = vld [vmem:[#allocation10 + $0x70] sm:$0xff]
    %v949 = vld [vmem:[#allocation10 + $0x78] sm:$0xff]
    %950 = vmatprep.subr.mxu0 0.0
    %951 = vmatpush1.msra.mxu0 %v934
    %952 = vmatprep.subr.mxu0 0.0
    %953 = vmatpush1.msra.mxu0 %v935
    %954 = vmatprep.subr.mxu0 0.0
    %955 = vmatpush1.msra.mxu0 %v936
    %956 = vmatprep.subr.mxu0 0.0
    %957 = vmatpush1.msra.mxu0 %v937
    %958 = vmatprep.subr.mxu0 0.0
    %959 = vmatpush1.msra.mxu0 %v938
    %960 = vmatprep.subr.mxu0 0.0
    %961 = vmatpush1.msra.mxu0 %v939
    %962 = vmatprep.subr.mxu0 0.0
    %963 = vmatpush1.msra.mxu0 %v940
    %964 = vmatprep.subr.mxu0 0.0
    %965 = vmatpush1.msra.mxu0 %v941
    %966 = vmatprep.subr.mxu0 0.0
    %967 = vmatpush1.msra.mxu0 %v942
    %968 = vmatprep.subr.mxu0 0.0
    %969 = vmatpush1.msra.mxu0 %v943
    %970 = vmatprep.subr.mxu0 0.0
    %971 = vmatpush1.msra.mxu0 %v944
    %972 = vmatprep.subr.mxu0 0.0
    %973 = vmatpush1.msra.mxu0 %v945
    %974 = vmatprep.subr.mxu0 0.0
    %975 = vmatpush1.msra.mxu0 %v946
    %976 = vmatprep.subr.mxu0 0.0
    %977 = vmatpush1.msra.mxu0 %v947
    %978 = vmatprep.subr.mxu0 0.0
    %979 = vmatpush1.msra.mxu0 %v948
    %980 = vmatprep.subr.mxu0 0.0
    %981 = vmatpush1.msra.mxu0 %v949
    %982 = vmatprep.subr.mxu0 0.0
    %983 = vmatpush1.msra.mxu0 0.0
    %984 = vmatprep.subr.mxu0 0.0
    %985 = vmatpush1.msra.mxu0 0.0
    %986 = vmatprep.subr.mxu0 0.0
    %987 = vmatpush1.msra.mxu0 0.0
    %988 = vmatprep.subr.mxu0 0.0
    %989 = vmatpush1.msra.mxu0 0.0
    %990 = vmatprep.subr.mxu0 0.0
    %991 = vmatpush1.msra.mxu0 0.0
    %992 = vmatprep.subr.mxu0 0.0
    %993 = vmatpush1.msra.mxu0 0.0
    %994 = vmatprep.subr.mxu0 0.0
    %995 = vmatpush1.msra.mxu0 0.0
    %996 = vmatprep.subr.mxu0 0.0
    %997 = vmatpush1.msra.mxu0 0.0
    %998 = vmatprep.subr.mxu0 0.0
    %999 = vmatpush1.msra.mxu0 0.0
    %1000 = vmatprep.subr.mxu0 0.0
    %1001 = vmatpush1.msra.mxu0 0.0
    %1002 = vmatprep.subr.mxu0 0.0
    %1003 = vmatpush1.msra.mxu0 0.0
    %1004 = vmatprep.subr.mxu0 0.0
    %1005 = vmatpush1.msra.mxu0 0.0
    %1006 = vmatprep.subr.mxu0 0.0
    %1007 = vmatpush1.msra.mxu0 0.0
    %1008 = vmatprep.subr.mxu0 0.0
    %1009 = vmatpush1.msra.mxu0 0.0
    %1010 = vmatprep.subr.mxu0 0.0
    %1011 = vmatpush1.msra.mxu0 0.0
    %1012 = vmatprep.subr.mxu0 0.0
    %1013 = vmatpush1.msra.mxu0 0.0
    %1014 = vmatprep.mubr.f32.mxu0 0.0
    %1015 = vmatmul.mubr.f32.gmra.mrb[0].mxu0 %v933
    %v1016 = vpop.f32.mrb[0].mxu0
    %v1017 = vadd.f32 0.0, %v1016
    %v1018 = vpop.f32.mrb[0].mxu0
    %1019 = vdwg.mxu0
    %v1020 = vmul.f32 %v1017, 0.001953125
    %v1021 = vmul.f32 %v1020, %v1020
    %v1023 = vrot.slane %v1021, 7
    %v1025 = vsub.f32 %v1020, %v1023
    %v1026 = vld [vmem:[%s5] sm:$0x1]
    %v1027 = vadd.f32 %v1025, 1e-05
    %v1028 = vrsqrt.pop %v1027
    %v1031 = vunpack.c.l.s4 1966171168
    %v1032 = vunpack.c.0.s8 %v1031
    %v1033 = vlaneseq
    %v1034 = vshrl.u32 %v1033, 7
    %v1035 = vsub.s32 %v1032, %v1034
    %v1036 = vrot.slane %v1028, %v1035
    %v1037 = vcombine.high %v1036, %v1036
    %v1039 = vunpack.c.l.s4 1966171168
    %v1040 = vunpack.c.0.s8 %v1039
    %v1041 = vlaneseq
    %v1042 = vshrl.u32 %v1041, 7
    %v1043 = vsub.s32 %v1040, %v1042
    %v1044 = vrot.slane %v1037, %v1043
    %v1046 = vmul.f32 %v1026, %v1044
    %v1047 = vld [vmem:[%s6] sm:$0x1]
    %v1048 = vmul.f32 %v1020, %v1046
    %v1049 = vsub.f32 %v1047, %v1048
    %v1051 = vlaneseq
    %v1052 = vshrl.u32 %v1051, 7
    %v1053 = vsub.s32 0, %v1052
    %v1054 = vrot.slane %v1046, %v1053
    %v1056 = vmul.f32 %v907, %v1054
    %v1057 = vmul.f32 %v908, %v1054
    %v1058 = vmul.f32 %v909, %v1054
    %v1059 = vmul.f32 %v910, %v1054
    %v1061 = vlaneseq
    %v1062 = vshrl.u32 %v1061, 7
    %v1063 = vsub.s32 0, %v1062
    %v1064 = vrot.slane %v1049, %v1063
    %v1066 = vadd.f32 %v1056, %v1064
    %v1067 = vadd.f32 %v1057, %v1064
    %v1068 = vadd.f32 %v1058, %v1064
    %v1069 = vadd.f32 %v1059, %v1064
    %v1070 = vadd.f32 %v1066, %v93
    %v1071 = vadd.f32 %v1067, %v94
    %v1072 = vadd.f32 %v1068, %v95
    %v1073 = vadd.f32 %v1069, %v96
    %v1074 = vmax.f32 %v1070, 0.0
    %v1075 = vmax.f32 %v1071, 0.0
    %v1076 = vmax.f32 %v1072, 0.0
    %v1077 = vmax.f32 %v1073, 0.0
    %1078 = vst [vmem:[#allocation12] sm:$0xff] %v1074
    %1079 = vst [vmem:[#allocation12 + $0x8] sm:$0xff] %v1075
    %1080 = vst [vmem:[#allocation12 + $0x10] sm:$0xff] %v1076
    %1081 = vst [vmem:[#allocation12 + $0x18] sm:$0xff] %v1077
    // Predicated region
    $region50: #{tpu_custom_call.1} parent=1 // pred_check
      _
    $region51: #{tpu_custom_call.1} parent=1 // pred_check_branch
      %1083 = sbr.rel (0) target = $region53
    $region52: #{tpu_custom_call.1} parent=1 // pred_region
      %s1085 = ssub.s32 512, 512
      %1086 = vsyncadd [#allocation6], %s1085
      %s1087 = sshll.u32 [#allocation12], 4
      %s1088 = int_to_ptr.vmem [resolvable:$true] %s1087
      %1093 = dma.vmem_to_hbm [thread:$0]  %s1088, 512, %s8, [#allocation6], 128, 128, 8
    $region53: #{tpu_custom_call.1} parent=1 // pred_fallthru
      _
    // Predicated region
    $region54: #{tpu_custom_call.1} parent=1 // pred_check
      _
    $region55: #{tpu_custom_call.1} parent=1 // pred_check_branch
      %1095 = sbr.rel (0) target = $region57
    $region56: #{tpu_custom_call.1} parent=1 // pred_region
      %1096 = dma.done [#allocation6], 512
    $region57: #{tpu_custom_call.1} parent=1 // pred_fallthru
      _
    %1097 = vsyncpa [#allocation5], 1
    %1098 = vsyncpa [#allocation8], 1
    %1099 = vsyncpa [#allocation11], 1
    %1100 = vsyncpa [#allocation6], 1

</llo_original>
